<compile_context>
chip_gen: v7x
topology: tpu7x:2x2x1
jax: 0.10.0
libtpu: 0.0.40
codegen_flags: <defaults>
</compile_context>

<pallas_src>
import functools

import jax
import jax.numpy as jnp
from jax import lax
from jax.experimental import pallas as pl
from jax.experimental.pallas import tpu as pltpu

EPS = 1e-5
N_CLASSES = 10
D_IN = 28 * 28      # 784
D_H1 = 256
D_H2 = 128
OUT_PAD = 128       # lane-dense padded logits width


def _mlp_bn_kernel(x_ref, w1_ref, g1_ref, be1_ref, w2_ref, g2_ref, be2_ref,
                   w3_ref, b3_ref, o_ref, s1, q1, s2, q2, *, n_rows, block_m):
    """One (phase, batch_tile) grid step.  phase: 0 = BN1 stats, 1 = BN2 stats, 2 = emit."""
    p = pl.program_id(0)
    i = pl.program_id(1)
    inv_b = 1.0 / n_rows

    # Zero the cross-tile stats accumulators at the very first grid step.
    @pl.when((p == 0) & (i == 0))
    def _init():
        s1[...] = jnp.zeros_like(s1)
        q1[...] = jnp.zeros_like(q1)
        s2[...] = jnp.zeros_like(s2)
        q2[...] = jnp.zeros_like(q2)

    # Row-validity mask for a possibly ragged last batch tile.  OOB tail rows hold undefined
    # bits (possibly NaN/Inf), so mask with jnp.where (a multiplicative mask would keep NaN).
    row_ids = lax.broadcasted_iota(jnp.int32, (block_m, 1), 0) + i * block_m
    valid = row_ids < n_rows

    # ---- Linear(784->256); b1 cancels exactly under training-mode BN mean subtraction ----
    # x arrives as f32 and is cast to bf16 in-kernel (single HBM read, no wrapper repack).
    x_bf = x_ref[...].astype(jnp.bfloat16)
    h1 = jnp.dot(x_bf, w1_ref[...], preferred_element_type=jnp.float32)

    @pl.when(p == 0)
    def _stats1():
        h1m = jnp.where(valid, h1, 0.0)
        s1[...] += jnp.sum(h1m, axis=0, keepdims=True)
        q1[...] += jnp.sum(h1m * h1m, axis=0, keepdims=True)

    @pl.when(p >= 1)
    def _apply():
        # Folded training-mode BN1 (biased variance) + ReLU.  f32 epilogue math (safe on v5e);
        # E[x^2]-E[x]^2 is clamped at 0 (see review note on cancellation at extreme scales).
        mu1 = s1[...] * inv_b
        var1 = jnp.maximum(q1[...] * inv_b - mu1 * mu1, 0.0)
        scale1 = g1_ref[...] * lax.rsqrt(var1 + EPS)
        shift1 = be1_ref[...] - mu1 * scale1
        a1 = jnp.where(valid, jnp.maximum(h1 * scale1 + shift1, 0.0), 0.0)

        # ---- Linear(256->128); b2 cancelled.  Masked a1 -> tail rows contribute 0 to stats. ----
        h2 = jnp.dot(a1.astype(jnp.bfloat16), w2_ref[...],
                     preferred_element_type=jnp.float32)

        @pl.when(p == 1)
        def _stats2():
            s2[...] += jnp.sum(h2, axis=0, keepdims=True)
            q2[...] += jnp.sum(h2 * h2, axis=0, keepdims=True)

        @pl.when(p == 2)
        def _emit():
            mu2 = s2[...] * inv_b
            var2 = jnp.maximum(q2[...] * inv_b - mu2 * mu2, 0.0)
            scale2 = g2_ref[...] * lax.rsqrt(var2 + EPS)
            shift2 = be2_ref[...] - mu2 * scale2
            a2 = jnp.maximum(h2 * scale2 + shift2, 0.0).astype(jnp.bfloat16)
            # ---- Linear(128->10), columns padded to 128 lanes (cols >= 10 are zero) ----
            o_ref[...] = (jnp.dot(a2, w3_ref[...], preferred_element_type=jnp.float32)
                          + b3_ref[...]).astype(o_ref.dtype)


def prepare_params(torch_params):
    """One-time conversion of PyTorch-layout f32 params into kernel layout (hoisted out of
    the per-call forward).  Linear weights become (in, out) bf16; the last layer is padded to
    128 output columns; b1/b2 are dropped (cancelled by training-mode BN)."""
    (w1, b1, g1, be1, w2, b2, g2, be2, w3, b3) = torch_params
    del b1, b2
    pad = OUT_PAD - w3.shape[0]
    return (
        jnp.asarray(w1, jnp.float32).T.astype(jnp.bfloat16),          # (784, 256)
        jnp.asarray(g1, jnp.float32).reshape(1, -1),
        jnp.asarray(be1, jnp.float32).reshape(1, -1),
        jnp.asarray(w2, jnp.float32).T.astype(jnp.bfloat16),          # (256, 128)
        jnp.asarray(g2, jnp.float32).reshape(1, -1),
        jnp.asarray(be2, jnp.float32).reshape(1, -1),
        jnp.pad(jnp.asarray(w3, jnp.float32).T, ((0, 0), (0, pad))).astype(jnp.bfloat16),
        jnp.pad(jnp.asarray(b3, jnp.float32).reshape(1, -1), ((0, 0), (0, pad))),
    )


@functools.partial(jax.jit, static_argnames=("block_m",))
def mnist_network_forward(x, kernel_params, *, block_m=256):
    """x: (B, 784) f32 (raw, unpadded).  kernel_params: output of prepare_params.

    block_m: batch tile (rows) per grid step; keep it a multiple of 16 (bf16 sublane packing),
    256 is the MXU-filling choice on v6e/v7x.  Consumers that can read the padded (B, 128)
    slab directly (or accept bf16 logits) can skip the final slice / keep the store cheaper.
    """
    (w1, g1, be1, w2, g2, be2, w3p, b3p) = kernel_params
    B = x.shape[0]
    assert B > 1, "training-mode BatchNorm1d requires batch size > 1"
    x = x.astype(jnp.float32)

    tm = B if B <= block_m else block_m
    nbt = pl.cdiv(B, tm)
    grid = (3, nbt)   # (phase, batch_tile): phase outer so BN stats are complete before use

    kernel = functools.partial(_mlp_bn_kernel, n_rows=B, block_m=tm)

    const = lambda p, i: (0, 0)   # weights: fetched once, VMEM-resident across all steps
    in_specs = [
        pl.BlockSpec((tm, D_IN), lambda p, i: (i, 0)),     # x: streamed per batch tile
        pl.BlockSpec((D_IN, D_H1), const),                 # w1 bf16
        pl.BlockSpec((1, D_H1), const),                    # gamma1
        pl.BlockSpec((1, D_H1), const),                    # beta1
        pl.BlockSpec((D_H1, D_H2), const),                 # w2 bf16
        pl.BlockSpec((1, D_H2), const),                    # gamma2
        pl.BlockSpec((1, D_H2), const),                    # beta2
        pl.BlockSpec((D_H2, OUT_PAD), const),              # w3 bf16 (padded cols)
        pl.BlockSpec((1, OUT_PAD), const),                 # b3 (padded cols)
    ]
    # Output is only written in phase 2; map phases 0/1 to a dummy block so the writeback
    # of unwritten VMEM never happens and each output tile is stored exactly once.
    out_specs = pl.BlockSpec((tm, OUT_PAD),
                             lambda p, i: (jnp.where(p == 2, i, 0), 0))

    out_pad = pl.pallas_call(
        kernel,
        out_shape=jax.ShapeDtypeStruct((B, OUT_PAD), jnp.float32),
        grid=grid,
        in_specs=in_specs,
        out_specs=out_specs,
        scratch_shapes=[
            pltpu.VMEM((1, D_H1), jnp.float32),   # s1  (sum of h1)
            pltpu.VMEM((1, D_H1), jnp.float32),   # q1  (sum of h1^2)
            pltpu.VMEM((1, D_H2), jnp.float32),   # s2
            pltpu.VMEM((1, D_H2), jnp.float32),   # q2
        ],
        compiler_params=pltpu.CompilerParams(
            # Both axes are sequential: phase ordering + cross-tile stats accumulation.
            dimension_semantics=("arbitrary", "arbitrary"),
            # Sized for v7x (32 MiB default scoped / 64 MiB physical); working set at
            # block_m=256 is only a few MiB, so this fits v5e/v6e/v7x.
            vmem_limit_bytes=32 * 1024 * 1024,
        ),
    )(x, w1, g1, be1, w2, g2, be2, w3p, b3p)

    return out_pad[:, :N_CLASSES]


# ----------------------------- test scaffolding -----------------------------

def _make_params(key):
    """PyTorch-layout params: Linear weight (out, in), 1-D biases / BN affine params."""
    ks = jax.random.split(key, 10)
    w1 = jax.random.normal(ks[0], (D_H1, D_IN), jnp.float32) * 0.02
    b1 = jax.random.normal(ks[1], (D_H1,), jnp.float32) * 0.01
    w2 = jax.random.normal(ks[2], (D_H2, D_H1), jnp.float32) * 0.02
    b2 = jax.random.normal(ks[3], (D_H2,), jnp.float32) * 0.01
    w3 = jax.random.normal(ks[4], (N_CLASSES, D_H2), jnp.float32) * 0.02
    b3 = jax.random.normal(ks[5], (N_CLASSES,), jnp.float32) * 0.01
    g1 = 1.0 + 0.1 * jax.random.normal(ks[6], (D_H1,), jnp.float32)
    be1 = 0.1 * jax.random.normal(ks[7], (D_H1,), jnp.float32)
    g2 = 1.0 + 0.1 * jax.random.normal(ks[8], (D_H2,), jnp.float32)
    be2 = 0.1 * jax.random.normal(ks[9], (D_H2,), jnp.float32)
    return (w1, b1, g1, be1, w2, b2, g2, be2, w3, b3)


def _reference_forward_f32(x, torch_params):
    """Faithful f32 reference of the PyTorch module (training-mode BN)."""
    (w1, b1, g1, be1, w2, b2, g2, be2, w3, b3) = torch_params

    def bn(h, g, be):
        mu = jnp.mean(h, axis=0, keepdims=True)
        var = jnp.mean((h - mu) ** 2, axis=0, keepdims=True)
        return (h - mu) * lax.rsqrt(var + EPS) * g + be

    h1 = jnp.maximum(bn(x @ w1.T + b1, g1, be1), 0.0)
    h2 = jnp.maximum(bn(h1 @ w2.T + b2, g2, be2), 0.0)
    return h2 @ w3.T + b3


def _reference_forward_bf16_matched(x, torch_params):
    """Reference mirroring the kernel numerics (bf16 dots, folded BN, dropped b1/b2)."""
    (w1, b1, g1, be1, w2, b2, g2, be2, w3, b3) = torch_params
    del b1, b2
    bf = jnp.bfloat16

    def bn_relu(h, g, be):
        mu = jnp.mean(h, axis=0, keepdims=True)
        var = jnp.maximum(jnp.mean(h * h, axis=0, keepdims=True) - mu * mu, 0.0)
        scale = g * lax.rsqrt(var + EPS)
        return jnp.maximum(h * scale + (be - mu * scale), 0.0)

    h1 = jnp.dot(x.astype(bf), w1.T.astype(bf), preferred_element_type=jnp.float32)
    a1 = bn_relu(h1, g1, be1).astype(bf)
    h2 = jnp.dot(a1, w2.T.astype(bf), preferred_element_type=jnp.float32)
    a2 = bn_relu(h2, g2, be2).astype(bf)
    return jnp.dot(a2, w3.T.astype(bf), preferred_element_type=jnp.float32) + b3


if __name__ == "__main__":
    key = jax.random.PRNGKey(0)
    k_x, k_p = jax.random.split(key)

    # Small test batch: multiple of 16 (bf16 sublane packing), >1 for training-mode BN.
    B = 256
    x = jax.random.normal(k_x, (B, D_IN), jnp.float32)
    torch_params = _make_params(k_p)

    # One-time parameter preparation, outside the jitted per-call path.
    kparams = prepare_params(torch_params)

    # block_m=128 -> 2 batch tiles: exercises the (phase, batch_tile) BN-stats pipeline.
    out = jax.block_until_ready(mnist_network_forward(x, kparams, block_m=128))
    assert out.shape == (B, N_CLASSES)
    assert bool(jnp.all(jnp.isfinite(out)))

    ref_matched = _reference_forward_bf16_matched(x, torch_params)
    ref_f32 = _reference_forward_f32(x, torch_params)

    # Tight check against a reference with identical (bf16-dot, folded-BN) numerics.
    assert jnp.allclose(out, ref_matched, atol=3e-3, rtol=3e-3), (
        "mismatch vs bf16-matched reference: "
        f"max abs err {jnp.max(jnp.abs(out - ref_matched))}")
    # Semantic check against the full-f32 PyTorch-equivalent forward (bf16 weights loosen this).
    assert jnp.allclose(out, ref_f32, atol=6e-2, rtol=6e-2), (
        "mismatch vs f32 reference: "
        f"max abs err {jnp.max(jnp.abs(out - ref_f32))}")

    print("KERNEL_OK")
</pallas_src>

<mosaic_0001>
module attributes {stable_mosaic.version = 11 : i64} {
  func.func @_mlp_bn_kernel(%arg0: i32, %arg1: i32, %arg2: memref<128x784xf32, #tpu.memory_space<vmem>>, %arg3: memref<784x256xbf16, #tpu.memory_space<vmem>>, %arg4: memref<1x256xf32, #tpu.memory_space<vmem>>, %arg5: memref<1x256xf32, #tpu.memory_space<vmem>>, %arg6: memref<256x128xbf16, #tpu.memory_space<vmem>>, %arg7: memref<1x128xf32, #tpu.memory_space<vmem>>, %arg8: memref<1x128xf32, #tpu.memory_space<vmem>>, %arg9: memref<128x128xbf16, #tpu.memory_space<vmem>>, %arg10: memref<1x128xf32, #tpu.memory_space<vmem>>, %arg11: memref<128x128xf32, #tpu.memory_space<vmem>>, %arg12: memref<1x256xf32, #tpu.memory_space<vmem>>, %arg13: memref<1x256xf32, #tpu.memory_space<vmem>>, %arg14: memref<1x128xf32, #tpu.memory_space<vmem>>, %arg15: memref<1x128xf32, #tpu.memory_space<vmem>>) attributes {dimension_semantics = [#tpu.dimension_semantics<arbitrary>, #tpu.dimension_semantics<arbitrary>], iteration_bounds = array<i64: 3, 2>, scalar_prefetch = 0 : i64, scratch_operands = 4 : i64, tpu.core_type = #tpu.core_type<tc>, window_params = [{transform_indices = @transform_0, window_bounds = array<i64: 128, 784>}, {pipeline_mode = #tpu.pipeline_mode<synchronous>, transform_indices = @transform_1, window_bounds = array<i64: 784, 256>}, {pipeline_mode = #tpu.pipeline_mode<synchronous>, transform_indices = @transform_2, window_bounds = array<i64: 1, 256>}, {pipeline_mode = #tpu.pipeline_mode<synchronous>, transform_indices = @transform_3, window_bounds = array<i64: 1, 256>}, {pipeline_mode = #tpu.pipeline_mode<synchronous>, transform_indices = @transform_4, window_bounds = array<i64: 256, 128>}, {pipeline_mode = #tpu.pipeline_mode<synchronous>, transform_indices = @transform_5, window_bounds = array<i64: 1, 128>}, {pipeline_mode = #tpu.pipeline_mode<synchronous>, transform_indices = @transform_6, window_bounds = array<i64: 1, 128>}, {pipeline_mode = #tpu.pipeline_mode<synchronous>, transform_indices = @transform_7, window_bounds = array<i64: 128, 128>}, {pipeline_mode = #tpu.pipeline_mode<synchronous>, transform_indices = @transform_8, window_bounds = array<i64: 1, 128>}, {transform_indices = @transform_9, window_bounds = array<i64: 128, 128>}]} {
    %c0_i32 = arith.constant 0 : i32
    %0 = arith.cmpi eq, %arg0, %c0_i32 : i32
    %c0_i32_0 = arith.constant 0 : i32
    %1 = arith.cmpi eq, %arg1, %c0_i32_0 : i32
    %2 = arith.andi %0, %1 : i1
    %3 = arith.extui %2 : i1 to i32
    %c0_i32_1 = arith.constant 0 : i32
    %4 = arith.cmpi ne, %3, %c0_i32_1 : i32
    scf.if %4 {
      %cst_8 = arith.constant 0.000000e+00 : f32
      %21 = vector.broadcast %cst_8 : f32 to vector<1x256xf32>
      %c0_9 = arith.constant 0 : index
      %c0_10 = arith.constant 0 : index
      %22 = vector.load %arg12[%c0_9, %c0_10] : memref<1x256xf32, #tpu.memory_space<vmem>>, vector<1x256xf32>
      tpu.vector_store %arg12[%c0_9, %c0_10], %21 {strides = array<i32>} : memref<1x256xf32, #tpu.memory_space<vmem>>, vector<1x256xf32>,
      %cst_11 = arith.constant 0.000000e+00 : f32
      %23 = vector.broadcast %cst_11 : f32 to vector<1x256xf32>
      %c0_12 = arith.constant 0 : index
      %c0_13 = arith.constant 0 : index
      %24 = vector.load %arg13[%c0_12, %c0_13] : memref<1x256xf32, #tpu.memory_space<vmem>>, vector<1x256xf32>
      tpu.vector_store %arg13[%c0_12, %c0_13], %23 {strides = array<i32>} : memref<1x256xf32, #tpu.memory_space<vmem>>, vector<1x256xf32>,
      %cst_14 = arith.constant 0.000000e+00 : f32
      %25 = vector.broadcast %cst_14 : f32 to vector<1x128xf32>
      %c0_15 = arith.constant 0 : index
      %c0_16 = arith.constant 0 : index
      %26 = vector.load %arg14[%c0_15, %c0_16] : memref<1x128xf32, #tpu.memory_space<vmem>>, vector<1x128xf32>
      tpu.vector_store %arg14[%c0_15, %c0_16], %25 {strides = array<i32>} : memref<1x128xf32, #tpu.memory_space<vmem>>, vector<1x128xf32>,
      %cst_17 = arith.constant 0.000000e+00 : f32
      %27 = vector.broadcast %cst_17 : f32 to vector<1x128xf32>
      %c0_18 = arith.constant 0 : index
      %c0_19 = arith.constant 0 : index
      %28 = vector.load %arg15[%c0_18, %c0_19] : memref<1x128xf32, #tpu.memory_space<vmem>>, vector<1x128xf32>
      tpu.vector_store %arg15[%c0_18, %c0_19], %27 {strides = array<i32>} : memref<1x128xf32, #tpu.memory_space<vmem>>, vector<1x128xf32>,
    } else {
    }
    %5 = tpu.iota {dimensions = array<i32: 0>} : vector<128x1xi32>
    %c128_i32 = arith.constant 128 : i32
    %6 = arith.muli %arg1, %c128_i32 : i32
    %7 = vector.broadcast %6 : i32 to vector<128x1xi32>
    %8 = arith.addi %5, %7 : vector<128x1xi32>
    %c256_i32 = arith.constant 256 : i32
    %9 = vector.broadcast %c256_i32 : i32 to vector<128x1xi32>
    %10 = arith.cmpi slt, %8, %9 : vector<128x1xi32>
    %c0 = arith.constant 0 : index
    %c0_2 = arith.constant 0 : index
    %11 = vector.load %arg2[%c0, %c0_2] : memref<128x784xf32, #tpu.memory_space<vmem>>, vector<128x784xf32>
    %12 = arith.truncf %11 : vector<128x784xf32> to vector<128x784xbf16>
    %c0_3 = arith.constant 0 : index
    %c0_4 = arith.constant 0 : index
    %13 = vector.load %arg3[%c0_3, %c0_4] : memref<784x256xbf16, #tpu.memory_space<vmem>>, vector<784x256xbf16>
    %cst = arith.constant dense<0.000000e+00> : vector<128x256xf32>
    %14 = tpu.matmul %12, %13, %cst {dimension_numbers = #tpu.dot_dimension_numbers<[1], [0], [0], [1], [0, 0, 1, 1], [], []>} : vector<128x784xbf16>, vector<784x256xbf16>, vector<128x256xf32> -> vector<128x256xf32>
    %c0_i32_5 = arith.constant 0 : i32
    %15 = arith.cmpi eq, %arg0, %c0_i32_5 : i32
    %16 = arith.extui %15 : i1 to i32
    %c0_i32_6 = arith.constant 0 : i32
    %17 = arith.cmpi ne, %16, %c0_i32_6 : i32
    scf.if %17 {
      %cst_8 = arith.constant 0.000000e+00 : f32
      %21 = vector.shape_cast %10 : vector<128x1xi1> to vector<128x1xi1>
      %22 = vector.broadcast %21 : vector<128x1xi1> to vector<128x256xi1>
      %23 = vector.broadcast %cst_8 : f32 to vector<128x256xf32>
      %24 = arith.select %22, %14, %23 : vector<128x256xi1>, vector<128x256xf32>
      %c0_9 = arith.constant 0 : index
      %c0_10 = arith.constant 0 : index
      %25 = vector.load %arg12[%c0_9, %c0_10] : memref<1x256xf32, #tpu.memory_space<vmem>>, vector<1x256xf32>
      %cst_11 = arith.constant dense<0.000000e+00> : vector<256xf32>
      %26 = vector.multi_reduction <add>, %24, %cst_11 [0] : vector<128x256xf32> to vector<256xf32>
      %27 = vector.shape_cast %26 : vector<256xf32> to vector<1x256xf32>
      %28 = arith.addf %25, %27 : vector<1x256xf32>
      %c0_12 = arith.constant 0 : index
      %c0_13 = arith.constant 0 : index
      %29 = vector.load %arg12[%c0_12, %c0_13] : memref<1x256xf32, #tpu.memory_space<vmem>>, vector<1x256xf32>
      tpu.vector_store %arg12[%c0_12, %c0_13], %28 {strides = array<i32>} : memref<1x256xf32, #tpu.memory_space<vmem>>, vector<1x256xf32>,
      %c0_14 = arith.constant 0 : index
      %c0_15 = arith.constant 0 : index
      %30 = vector.load %arg13[%c0_14, %c0_15] : memref<1x256xf32, #tpu.memory_space<vmem>>, vector<1x256xf32>
      %31 = arith.mulf %24, %24 : vector<128x256xf32>
      %cst_16 = arith.constant dense<0.000000e+00> : vector<256xf32>
      %32 = vector.multi_reduction <add>, %31, %cst_16 [0] : vector<128x256xf32> to vector<256xf32>
      %33 = vector.shape_cast %32 : vector<256xf32> to vector<1x256xf32>
      %34 = arith.addf %30, %33 : vector<1x256xf32>
      %c0_17 = arith.constant 0 : index
      %c0_18 = arith.constant 0 : index
      %35 = vector.load %arg13[%c0_17, %c0_18] : memref<1x256xf32, #tpu.memory_space<vmem>>, vector<1x256xf32>
      tpu.vector_store %arg13[%c0_17, %c0_18], %34 {strides = array<i32>} : memref<1x256xf32, #tpu.memory_space<vmem>>, vector<1x256xf32>,
    } else {
    }
    %c1_i32 = arith.constant 1 : i32
    %18 = arith.cmpi sge, %arg0, %c1_i32 : i32
    %19 = arith.extui %18 : i1 to i32
    %c0_i32_7 = arith.constant 0 : i32
    %20 = arith.cmpi ne, %19, %c0_i32_7 : i32
    scf.if %20 {
      %c0_8 = arith.constant 0 : index
      %c0_9 = arith.constant 0 : index
      %21 = vector.load %arg12[%c0_8, %c0_9] : memref<1x256xf32, #tpu.memory_space<vmem>>, vector<1x256xf32>
      %cst_10 = arith.constant 3.906250e-03 : f32
      %22 = vector.broadcast %cst_10 : f32 to vector<1x256xf32>
      %23 = arith.mulf %21, %22 : vector<1x256xf32>
      %c0_11 = arith.constant 0 : index
      %c0_12 = arith.constant 0 : index
      %24 = vector.load %arg13[%c0_11, %c0_12] : memref<1x256xf32, #tpu.memory_space<vmem>>, vector<1x256xf32>
      %cst_13 = arith.constant 3.906250e-03 : f32
      %25 = vector.broadcast %cst_13 : f32 to vector<1x256xf32>
      %26 = arith.mulf %24, %25 : vector<1x256xf32>
      %27 = arith.mulf %23, %23 : vector<1x256xf32>
      %28 = arith.subf %26, %27 : vector<1x256xf32>
      %cst_14 = arith.constant 0.000000e+00 : f32
      %29 = vector.broadcast %cst_14 : f32 to vector<1x256xf32>
      %30 = arith.maximumf %28, %29 : vector<1x256xf32>
      %c0_15 = arith.constant 0 : index
      %c0_16 = arith.constant 0 : index
      %31 = vector.load %arg4[%c0_15, %c0_16] : memref<1x256xf32, #tpu.memory_space<vmem>>, vector<1x256xf32>
      %cst_17 = arith.constant 9.99999974E-6 : f32
      %32 = vector.broadcast %cst_17 : f32 to vector<1x256xf32>
      %33 = arith.addf %30, %32 : vector<1x256xf32>
      %34 = math.rsqrt %33 : vector<1x256xf32>
      %35 = arith.mulf %31, %34 : vector<1x256xf32>
      %c0_18 = arith.constant 0 : index
      %c0_19 = arith.constant 0 : index
      %36 = vector.load %arg5[%c0_18, %c0_19] : memref<1x256xf32, #tpu.memory_space<vmem>>, vector<1x256xf32>
      %37 = arith.mulf %23, %35 : vector<1x256xf32>
      %38 = arith.subf %36, %37 : vector<1x256xf32>
      %39 = vector.broadcast %35 : vector<1x256xf32> to vector<128x256xf32>
      %40 = arith.mulf %14, %39 : vector<128x256xf32>
      %41 = vector.broadcast %38 : vector<1x256xf32> to vector<128x256xf32>
      %42 = arith.addf %40, %41 : vector<128x256xf32>
      %cst_20 = arith.constant 0.000000e+00 : f32
      %43 = vector.broadcast %cst_20 : f32 to vector<128x256xf32>
      %44 = arith.maximumf %42, %43 : vector<128x256xf32>
      %cst_21 = arith.constant 0.000000e+00 : f32
      %45 = vector.shape_cast %10 : vector<128x1xi1> to vector<128x1xi1>
      %46 = vector.broadcast %45 : vector<128x1xi1> to vector<128x256xi1>
      %47 = vector.broadcast %cst_21 : f32 to vector<128x256xf32>
      %48 = arith.select %46, %44, %47 : vector<128x256xi1>, vector<128x256xf32>
      %49 = arith.truncf %48 : vector<128x256xf32> to vector<128x256xbf16>
      %c0_22 = arith.constant 0 : index
      %c0_23 = arith.constant 0 : index
      %50 = vector.load %arg6[%c0_22, %c0_23] : memref<256x128xbf16, #tpu.memory_space<vmem>>, vector<256x128xbf16>
      %cst_24 = arith.constant dense<0.000000e+00> : vector<128x128xf32>
      %51 = tpu.matmul %49, %50, %cst_24 {dimension_numbers = #tpu.dot_dimension_numbers<[1], [0], [0], [1], [0, 0, 1, 1], [], []>} : vector<128x256xbf16>, vector<256x128xbf16>, vector<128x128xf32> -> vector<128x128xf32>
      %c1_i32_25 = arith.constant 1 : i32
      %52 = arith.cmpi eq, %arg0, %c1_i32_25 : i32
      %53 = arith.extui %52 : i1 to i32
      %c0_i32_26 = arith.constant 0 : i32
      %54 = arith.cmpi ne, %53, %c0_i32_26 : i32
      scf.if %54 {
        %c0_28 = arith.constant 0 : index
        %c0_29 = arith.constant 0 : index
        %58 = vector.load %arg14[%c0_28, %c0_29] : memref<1x128xf32, #tpu.memory_space<vmem>>, vector<1x128xf32>
        %cst_30 = arith.constant dense<0.000000e+00> : vector<128xf32>
        %59 = vector.multi_reduction <add>, %51, %cst_30 [0] : vector<128x128xf32> to vector<128xf32>
        %60 = vector.shape_cast %59 : vector<128xf32> to vector<1x128xf32>
        %61 = arith.addf %58, %60 : vector<1x128xf32>
        %c0_31 = arith.constant 0 : index
        %c0_32 = arith.constant 0 : index
        %62 = vector.load %arg14[%c0_31, %c0_32] : memref<1x128xf32, #tpu.memory_space<vmem>>, vector<1x128xf32>
        tpu.vector_store %arg14[%c0_31, %c0_32], %61 {strides = array<i32>} : memref<1x128xf32, #tpu.memory_space<vmem>>, vector<1x128xf32>,
        %c0_33 = arith.constant 0 : index
        %c0_34 = arith.constant 0 : index
        %63 = vector.load %arg15[%c0_33, %c0_34] : memref<1x128xf32, #tpu.memory_space<vmem>>, vector<1x128xf32>
        %64 = arith.mulf %51, %51 : vector<128x128xf32>
        %cst_35 = arith.constant dense<0.000000e+00> : vector<128xf32>
        %65 = vector.multi_reduction <add>, %64, %cst_35 [0] : vector<128x128xf32> to vector<128xf32>
        %66 = vector.shape_cast %65 : vector<128xf32> to vector<1x128xf32>
        %67 = arith.addf %63, %66 : vector<1x128xf32>
        %c0_36 = arith.constant 0 : index
        %c0_37 = arith.constant 0 : index
        %68 = vector.load %arg15[%c0_36, %c0_37] : memref<1x128xf32, #tpu.memory_space<vmem>>, vector<1x128xf32>
        tpu.vector_store %arg15[%c0_36, %c0_37], %67 {strides = array<i32>} : memref<1x128xf32, #tpu.memory_space<vmem>>, vector<1x128xf32>,
      } else {
      }
      %c2_i32 = arith.constant 2 : i32
      %55 = arith.cmpi eq, %arg0, %c2_i32 : i32
      %56 = arith.extui %55 : i1 to i32
      %c0_i32_27 = arith.constant 0 : i32
      %57 = arith.cmpi ne, %56, %c0_i32_27 : i32
      scf.if %57 {
        %c0_28 = arith.constant 0 : index
        %c0_29 = arith.constant 0 : index
        %58 = vector.load %arg14[%c0_28, %c0_29] : memref<1x128xf32, #tpu.memory_space<vmem>>, vector<1x128xf32>
        %cst_30 = arith.constant 3.906250e-03 : f32
        %59 = vector.broadcast %cst_30 : f32 to vector<1x128xf32>
        %60 = arith.mulf %58, %59 : vector<1x128xf32>
        %c0_31 = arith.constant 0 : index
        %c0_32 = arith.constant 0 : index
        %61 = vector.load %arg15[%c0_31, %c0_32] : memref<1x128xf32, #tpu.memory_space<vmem>>, vector<1x128xf32>
        %cst_33 = arith.constant 3.906250e-03 : f32
        %62 = vector.broadcast %cst_33 : f32 to vector<1x128xf32>
        %63 = arith.mulf %61, %62 : vector<1x128xf32>
        %64 = arith.mulf %60, %60 : vector<1x128xf32>
        %65 = arith.subf %63, %64 : vector<1x128xf32>
        %cst_34 = arith.constant 0.000000e+00 : f32
        %66 = vector.broadcast %cst_34 : f32 to vector<1x128xf32>
        %67 = arith.maximumf %65, %66 : vector<1x128xf32>
        %c0_35 = arith.constant 0 : index
        %c0_36 = arith.constant 0 : index
        %68 = vector.load %arg7[%c0_35, %c0_36] : memref<1x128xf32, #tpu.memory_space<vmem>>, vector<1x128xf32>
        %cst_37 = arith.constant 9.99999974E-6 : f32
        %69 = vector.broadcast %cst_37 : f32 to vector<1x128xf32>
        %70 = arith.addf %67, %69 : vector<1x128xf32>
        %71 = math.rsqrt %70 : vector<1x128xf32>
        %72 = arith.mulf %68, %71 : vector<1x128xf32>
        %c0_38 = arith.constant 0 : index
        %c0_39 = arith.constant 0 : index
        %73 = vector.load %arg8[%c0_38, %c0_39] : memref<1x128xf32, #tpu.memory_space<vmem>>, vector<1x128xf32>
        %74 = arith.mulf %60, %72 : vector<1x128xf32>
        %75 = arith.subf %73, %74 : vector<1x128xf32>
        %76 = vector.broadcast %72 : vector<1x128xf32> to vector<128x128xf32>
        %77 = arith.mulf %51, %76 : vector<128x128xf32>
        %78 = vector.broadcast %75 : vector<1x128xf32> to vector<128x128xf32>
        %79 = arith.addf %77, %78 : vector<128x128xf32>
        %cst_40 = arith.constant 0.000000e+00 : f32
        %80 = vector.broadcast %cst_40 : f32 to vector<128x128xf32>
        %81 = arith.maximumf %79, %80 : vector<128x128xf32>
        %82 = arith.truncf %81 : vector<128x128xf32> to vector<128x128xbf16>
        %c0_41 = arith.constant 0 : index
        %c0_42 = arith.constant 0 : index
        %83 = vector.load %arg9[%c0_41, %c0_42] : memref<128x128xbf16, #tpu.memory_space<vmem>>, vector<128x128xbf16>
        %cst_43 = arith.constant dense<0.000000e+00> : vector<128x128xf32>
        %84 = tpu.matmul %82, %83, %cst_43 {dimension_numbers = #tpu.dot_dimension_numbers<[1], [0], [0], [1], [0, 0, 1, 1], [], []>} : vector<128x128xbf16>, vector<128x128xbf16>, vector<128x128xf32> -> vector<128x128xf32>
        %c0_44 = arith.constant 0 : index
        %c0_45 = arith.constant 0 : index
        %85 = vector.load %arg10[%c0_44, %c0_45] : memref<1x128xf32, #tpu.memory_space<vmem>>, vector<1x128xf32>
        %86 = vector.broadcast %85 : vector<1x128xf32> to vector<128x128xf32>
        %87 = arith.addf %84, %86 : vector<128x128xf32>
        %c0_46 = arith.constant 0 : index
        %c0_47 = arith.constant 0 : index
        %88 = vector.load %arg11[%c0_46, %c0_47] : memref<128x128xf32, #tpu.memory_space<vmem>>, vector<128x128xf32>
        tpu.vector_store %arg11[%c0_46, %c0_47], %87 {strides = array<i32>} : memref<128x128xf32, #tpu.memory_space<vmem>>, vector<128x128xf32>,
      } else {
      }
    } else {
    }
    return
  }
  func.func @transform_0(%arg0: i32, %arg1: i32) -> (i32, i32) {
    %c0_i32 = arith.constant 0 : i32
    %c0_i32_0 = arith.constant 0 : i32
    return %arg1, %c0_i32 : i32, i32
  }
  func.func @transform_1(%arg0: i32, %arg1: i32) -> (i32, i32) {
    %c0_i32 = arith.constant 0 : i32
    %c0_i32_0 = arith.constant 0 : i32
    %c0_i32_1 = arith.constant 0 : i32
    return %c0_i32, %c0_i32_0 : i32, i32
  }
  func.func @transform_2(%arg0: i32, %arg1: i32) -> (i32, i32) {
    %c0_i32 = arith.constant 0 : i32
    %c0_i32_0 = arith.constant 0 : i32
    %c0_i32_1 = arith.constant 0 : i32
    return %c0_i32, %c0_i32_0 : i32, i32
  }
  func.func @transform_3(%arg0: i32, %arg1: i32) -> (i32, i32) {
    %c0_i32 = arith.constant 0 : i32
    %c0_i32_0 = arith.constant 0 : i32
    %c0_i32_1 = arith.constant 0 : i32
    return %c0_i32, %c0_i32_0 : i32, i32
  }
  func.func @transform_4(%arg0: i32, %arg1: i32) -> (i32, i32) {
    %c0_i32 = arith.constant 0 : i32
    %c0_i32_0 = arith.constant 0 : i32
    %c0_i32_1 = arith.constant 0 : i32
    return %c0_i32, %c0_i32_0 : i32, i32
  }
  func.func @transform_5(%arg0: i32, %arg1: i32) -> (i32, i32) {
    %c0_i32 = arith.constant 0 : i32
    %c0_i32_0 = arith.constant 0 : i32
    %c0_i32_1 = arith.constant 0 : i32
    return %c0_i32, %c0_i32_0 : i32, i32
  }
  func.func @transform_6(%arg0: i32, %arg1: i32) -> (i32, i32) {
    %c0_i32 = arith.constant 0 : i32
    %c0_i32_0 = arith.constant 0 : i32
    %c0_i32_1 = arith.constant 0 : i32
    return %c0_i32, %c0_i32_0 : i32, i32
  }
  func.func @transform_7(%arg0: i32, %arg1: i32) -> (i32, i32) {
    %c0_i32 = arith.constant 0 : i32
    %c0_i32_0 = arith.constant 0 : i32
    %c0_i32_1 = arith.constant 0 : i32
    return %c0_i32, %c0_i32_0 : i32, i32
  }
  func.func @transform_8(%arg0: i32, %arg1: i32) -> (i32, i32) {
    %c0_i32 = arith.constant 0 : i32
    %c0_i32_0 = arith.constant 0 : i32
    %c0_i32_1 = arith.constant 0 : i32
    return %c0_i32, %c0_i32_0 : i32, i32
  }
  func.func @transform_9(%arg0: i32, %arg1: i32) -> (i32, i32) {
    %c2_i32 = arith.constant 2 : i32
    %0 = arith.cmpi eq, %arg0, %c2_i32 : i32
    %c0_i32 = arith.constant 0 : i32
    %1 = arith.select %0, %arg1, %c0_i32 : i32
    %c0_i32_0 = arith.constant 0 : i32
    %c0_i32_1 = arith.constant 0 : i32
    return %1, %c0_i32_0 : i32, i32
  }
}

</mosaic_0001>

<llo_original>
// kernel: mnist_network_forward.1
$region0: #{mnist_network_forward.1}
  #allocation0 [shape = 'u32[]', space=smem, size = 0x4, offset = 0x4, fixed_abs, tag = 'smem constant byte address 0x4 - core index']
  #allocation1 [shape = 'u32[144,128]{1,0:T(1,128)}', space=vmem, size = 0x12000, scoped, tag = 'internal scratch']
  #allocation2 [shape = 'f32[1,256]{1,0:T(1,128)}', space=vmem, size = 0x400, scoped, tag = 'scratch operand']
  #allocation3 [shape = 'f32[1,256]{1,0:T(1,128)}', space=vmem, size = 0x400, scoped, tag = 'scratch operand']
  #allocation4 [shape = 'f32[1,128]{1,0:T(1,128)}', space=vmem, size = 0x200, scoped, tag = 'scratch operand']
  #allocation5 [shape = 'f32[1,128]{1,0:T(1,128)}', space=vmem, size = 0x200, scoped, tag = 'scratch operand']
  %s0 = inlined_call_operand.vmem [shape: f32[256,784], index: 0, kind: input, shape index: {}]
  %s1 = inlined_call_operand.vmem [shape: bf16[784,256], index: 1, kind: input, shape index: {}]
  %s2 = inlined_call_operand.vmem [shape: f32[1,256], index: 2, kind: input, shape index: {}]
  %s3 = inlined_call_operand.vmem [shape: f32[1,256], index: 3, kind: input, shape index: {}]
  %s4 = inlined_call_operand.vmem [shape: bf16[256,128], index: 4, kind: input, shape index: {}]
  %s5 = inlined_call_operand.vmem [shape: f32[1,128], index: 5, kind: input, shape index: {}]
  %s6 = inlined_call_operand.vmem [shape: f32[1,128], index: 6, kind: input, shape index: {}]
  %s7 = inlined_call_operand.vmem [shape: bf16[128,128], index: 7, kind: input, shape index: {}]
  %s8 = inlined_call_operand.vmem [shape: f32[1,128], index: 8, kind: input, shape index: {}]
  %s9 = inlined_call_operand.vmem [shape: f32[256,128], index: 9, kind: output, shape index: {}]
  %s10 = sld [smem:[#allocation0]]
  $region89: #{mnist_network_forward.1} parent=0
    _
  %s12 = ssub.s32 1, %s10
  %s13 = scalar_select 0, %s12, %s10
  loop: start=0, step=1, limit=8
  $region2: #{mnist_network_forward.1} parent=0 // loop_pre_header
    _
  $region3: #{mnist_network_forward.1} parent=0 // loop_header
    %s15 = sphi 0, %s19
    %p16 = scmp.ge.s32.totalorder %s15, 8
    %s22 = sphi 0, %s34
    %s23 = sphi 0, %s30
    %s24 = sphi 0, %s22
    %s25 = sphi 0, %s23
    %s26 = sphi 0, %s24
    %s27 = sphi 0, %s25
    %s37 = sphi 0, %s39
    %s40 = sphi 0, %s37
    %s41 = sphi 0, %s40
    %s57 = sphi 0, %s41
    %s61 = sphi 0, %s61
    %s63 = sphi 0, %s61
    %s64 = sphi 0, %s63
    %s78 = sphi 0, %s64
    %s82 = sphi 0, %s82
    %s84 = sphi 0, %s82
    %s85 = sphi 0, %s84
    %s99 = sphi 0, %s85
    %s103 = sphi 0, %s103
    %s105 = sphi 0, %s103
    %s106 = sphi 0, %s105
    %s120 = sphi 0, %s106
    %s124 = sphi 0, %s124
    %s126 = sphi 0, %s124
    %s127 = sphi 0, %s126
    %s141 = sphi 0, %s127
    %s145 = sphi 0, %s145
    %s147 = sphi 0, %s145
    %s148 = sphi 0, %s147
    %s162 = sphi 0, %s148
    %s166 = sphi 0, %s166
    %s168 = sphi 0, %s166
    %s169 = sphi 0, %s168
    %s183 = sphi 0, %s169
    %s187 = sphi 0, %s187
    %s189 = sphi 0, %s187
    %s190 = sphi 0, %s189
    %s204 = sphi 0, %s190
    %s208 = sphi 0, %s208
    %s210 = sphi 0, %s208
    %s211 = sphi 0, %s210
    %s225 = sphi 0, %s211
    %s235 = sphi 0, %s237
    %s238 = sphi 0, %s235
    %s239 = sphi 0, %s238
    %s255 = sphi 0, %s239
  $region4: #{mnist_network_forward.1} parent=0 // loop_header_branch
    %18 = sbr.rel (%p16) target = $region8
  $region5: #{mnist_network_forward.1} parent=0 // loop_body
    %s20 = ssub.s32 %s15, 1
    %s21 = ssub.s32 %s15, 2
    %s28 = sadd.s32 1, %s23
    %p29 = scmp.ge.s32.totalorder %s28, 2
    %s30 = scalar_select %p29, 0, %s28
    %s31 = sadd.s32 1, %s22
    %s32 = scalar_select %p29, %s31, %s22
    %p33 = scmp.ge.s32.totalorder %s32, 3
    %s34 = scalar_select %p33, 0, %s32
    %s35 = ssub.s32 %s23, %s30
    %p36 = scmp.eq.s32.totalorder %s35, 0
    %s38 = sadd.s32 %s37, 1
    %s39 = scalar_select %p36, %s37, %s38
    %p42 = pneg %p36
    %p43 = scmp.eq.s32.totalorder %s15, 5
    %p44 = por %p42, %p43
    %p45 = scmp.ne.s32.totalorder %s37, %s40
    %p46 = scmp.eq.s32.totalorder %s15, 0
    %p47 = por %p45, %p46
    %p48 = scmp.ne.s32.totalorder %s37, %s40
    %p49 = scmp.eq.s32.totalorder %s20, 5
    %p50 = por %p48, %p49
    %p51 = scmp.ne.s32.totalorder %s40, %s41
    %p52 = scmp.eq.s32.totalorder %s20, 0
    %p53 = por %p51, %p52
    %p54 = scmp.ne.s32.totalorder %s40, %s41
    %p55 = scmp.eq.s32.totalorder %s21, 5
    %p56 = por %p54, %p55
    %p58 = scmp.ne.s32.totalorder %s41, %s57
    %p59 = scmp.eq.s32.totalorder %s21, 0
    %p60 = por %p58, %p59
    %s62 = sadd.s32 %s61, 1
    %p65 = scmp.eq.s32.totalorder %s15, 5
    %p66 = scmp.ne.s32.totalorder %s61, %s63
    %p67 = scmp.eq.s32.totalorder %s15, 0
    %p68 = por %p66, %p67
    %p69 = scmp.ne.s32.totalorder %s61, %s63
    %p70 = scmp.eq.s32.totalorder %s20, 5
    %p71 = por %p69, %p70
    %p72 = scmp.ne.s32.totalorder %s63, %s64
    %p73 = scmp.eq.s32.totalorder %s20, 0
    %p74 = por %p72, %p73
    %p75 = scmp.ne.s32.totalorder %s63, %s64
    %p76 = scmp.eq.s32.totalorder %s21, 5
    %p77 = por %p75, %p76
    %p79 = scmp.ne.s32.totalorder %s64, %s78
    %p80 = scmp.eq.s32.totalorder %s21, 0
    %p81 = por %p79, %p80
    %s83 = sadd.s32 %s82, 1
    %p86 = scmp.eq.s32.totalorder %s15, 5
    %p87 = scmp.ne.s32.totalorder %s82, %s84
    %p88 = scmp.eq.s32.totalorder %s15, 0
    %p89 = por %p87, %p88
    %p90 = scmp.ne.s32.totalorder %s82, %s84
    %p91 = scmp.eq.s32.totalorder %s20, 5
    %p92 = por %p90, %p91
    %p93 = scmp.ne.s32.totalorder %s84, %s85
    %p94 = scmp.eq.s32.totalorder %s20, 0
    %p95 = por %p93, %p94
    %p96 = scmp.ne.s32.totalorder %s84, %s85
    %p97 = scmp.eq.s32.totalorder %s21, 5
    %p98 = por %p96, %p97
    %p100 = scmp.ne.s32.totalorder %s85, %s99
    %p101 = scmp.eq.s32.totalorder %s21, 0
    %p102 = por %p100, %p101
    %s104 = sadd.s32 %s103, 1
    %p107 = scmp.eq.s32.totalorder %s15, 5
    %p108 = scmp.ne.s32.totalorder %s103, %s105
    %p109 = scmp.eq.s32.totalorder %s15, 0
    %p110 = por %p108, %p109
    %p111 = scmp.ne.s32.totalorder %s103, %s105
    %p112 = scmp.eq.s32.totalorder %s20, 5
    %p113 = por %p111, %p112
    %p114 = scmp.ne.s32.totalorder %s105, %s106
    %p115 = scmp.eq.s32.totalorder %s20, 0
    %p116 = por %p114, %p115
    %p117 = scmp.ne.s32.totalorder %s105, %s106
    %p118 = scmp.eq.s32.totalorder %s21, 5
    %p119 = por %p117, %p118
    %p121 = scmp.ne.s32.totalorder %s106, %s120
    %p122 = scmp.eq.s32.totalorder %s21, 0
    %p123 = por %p121, %p122
    %s125 = sadd.s32 %s124, 1
    %p128 = scmp.eq.s32.totalorder %s15, 5
    %p129 = scmp.ne.s32.totalorder %s124, %s126
    %p130 = scmp.eq.s32.totalorder %s15, 0
    %p131 = por %p129, %p130
    %p132 = scmp.ne.s32.totalorder %s124, %s126
    %p133 = scmp.eq.s32.totalorder %s20, 5
    %p134 = por %p132, %p133
    %p135 = scmp.ne.s32.totalorder %s126, %s127
    %p136 = scmp.eq.s32.totalorder %s20, 0
    %p137 = por %p135, %p136
    %p138 = scmp.ne.s32.totalorder %s126, %s127
    %p139 = scmp.eq.s32.totalorder %s21, 5
    %p140 = por %p138, %p139
    %p142 = scmp.ne.s32.totalorder %s127, %s141
    %p143 = scmp.eq.s32.totalorder %s21, 0
    %p144 = por %p142, %p143
    %s146 = sadd.s32 %s145, 1
    %p149 = scmp.eq.s32.totalorder %s15, 5
    %p150 = scmp.ne.s32.totalorder %s145, %s147
    %p151 = scmp.eq.s32.totalorder %s15, 0
    %p152 = por %p150, %p151
    %p153 = scmp.ne.s32.totalorder %s145, %s147
    %p154 = scmp.eq.s32.totalorder %s20, 5
    %p155 = por %p153, %p154
    %p156 = scmp.ne.s32.totalorder %s147, %s148
    %p157 = scmp.eq.s32.totalorder %s20, 0
    %p158 = por %p156, %p157
    %p159 = scmp.ne.s32.totalorder %s147, %s148
    %p160 = scmp.eq.s32.totalorder %s21, 5
    %p161 = por %p159, %p160
    %p163 = scmp.ne.s32.totalorder %s148, %s162
    %p164 = scmp.eq.s32.totalorder %s21, 0
    %p165 = por %p163, %p164
    %s167 = sadd.s32 %s166, 1
    %p170 = scmp.eq.s32.totalorder %s15, 5
    %p171 = scmp.ne.s32.totalorder %s166, %s168
    %p172 = scmp.eq.s32.totalorder %s15, 0
    %p173 = por %p171, %p172
    %p174 = scmp.ne.s32.totalorder %s166, %s168
    %p175 = scmp.eq.s32.totalorder %s20, 5
    %p176 = por %p174, %p175
    %p177 = scmp.ne.s32.totalorder %s168, %s169
    %p178 = scmp.eq.s32.totalorder %s20, 0
    %p179 = por %p177, %p178
    %p180 = scmp.ne.s32.totalorder %s168, %s169
    %p181 = scmp.eq.s32.totalorder %s21, 5
    %p182 = por %p180, %p181
    %p184 = scmp.ne.s32.totalorder %s169, %s183
    %p185 = scmp.eq.s32.totalorder %s21, 0
    %p186 = por %p184, %p185
    %s188 = sadd.s32 %s187, 1
    %p191 = scmp.eq.s32.totalorder %s15, 5
    %p192 = scmp.ne.s32.totalorder %s187, %s189
    %p193 = scmp.eq.s32.totalorder %s15, 0
    %p194 = por %p192, %p193
    %p195 = scmp.ne.s32.totalorder %s187, %s189
    %p196 = scmp.eq.s32.totalorder %s20, 5
    %p197 = por %p195, %p196
    %p198 = scmp.ne.s32.totalorder %s189, %s190
    %p199 = scmp.eq.s32.totalorder %s20, 0
    %p200 = por %p198, %p199
    %p201 = scmp.ne.s32.totalorder %s189, %s190
    %p202 = scmp.eq.s32.totalorder %s21, 5
    %p203 = por %p201, %p202
    %p205 = scmp.ne.s32.totalorder %s190, %s204
    %p206 = scmp.eq.s32.totalorder %s21, 0
    %p207 = por %p205, %p206
    %s209 = sadd.s32 %s208, 1
    %p212 = scmp.eq.s32.totalorder %s15, 5
    %p213 = scmp.ne.s32.totalorder %s208, %s210
    %p214 = scmp.eq.s32.totalorder %s15, 0
    %p215 = por %p213, %p214
    %p216 = scmp.ne.s32.totalorder %s208, %s210
    %p217 = scmp.eq.s32.totalorder %s20, 5
    %p218 = por %p216, %p217
    %p219 = scmp.ne.s32.totalorder %s210, %s211
    %p220 = scmp.eq.s32.totalorder %s20, 0
    %p221 = por %p219, %p220
    %p222 = scmp.ne.s32.totalorder %s210, %s211
    %p223 = scmp.eq.s32.totalorder %s21, 5
    %p224 = por %p222, %p223
    %p226 = scmp.ne.s32.totalorder %s211, %s225
    %p227 = scmp.eq.s32.totalorder %s21, 0
    %p228 = por %p226, %p227
    %p229 = scmp.eq.s32.totalorder %s22, 2
    %s230 = scalar_select %p229, %s23, 0
    %p231 = scmp.eq.s32.totalorder %s34, 2
    %s232 = scalar_select %p231, %s30, 0
    %s233 = ssub.s32 %s230, %s232
    %p234 = scmp.eq.s32.totalorder %s233, 0
    %s236 = sadd.s32 %s235, 1
    %s237 = scalar_select %p234, %s235, %s236
    %p240 = pneg %p234
    %p241 = scmp.eq.s32.totalorder %s15, 5
    %p242 = por %p240, %p241
    %p243 = scmp.ne.s32.totalorder %s235, %s238
    %p244 = scmp.eq.s32.totalorder %s15, 0
    %p245 = por %p243, %p244
    %p246 = scmp.ne.s32.totalorder %s235, %s238
    %p247 = scmp.eq.s32.totalorder %s20, 5
    %p248 = por %p246, %p247
    %p249 = scmp.ne.s32.totalorder %s238, %s239
    %p250 = scmp.eq.s32.totalorder %s20, 0
    %p251 = por %p249, %p250
    %p252 = scmp.ne.s32.totalorder %s238, %s239
    %p253 = scmp.eq.s32.totalorder %s21, 5
    %p254 = por %p252, %p253
    %p256 = scmp.ne.s32.totalorder %s239, %s255
    %p257 = scmp.eq.s32.totalorder %s21, 0
    %p258 = por %p256, %p257
    %p259 = scmp.le.s32.totalorder 1, %s15
    %p260 = scmp.lt.s32.totalorder %s15, 7
    %p261 = pnand %p259, %p260
    %p262 = pneg %p261
    // Predicated region
    $region9: #{mnist_network_forward.1} parent=5 // pred_check
      _
    $region10: #{mnist_network_forward.1} parent=5 // pred_check_branch
      %264 = sbr.rel (%p261) target = $region12
    $region11: #{mnist_network_forward.1} parent=5 // pred_region
      %s265 = ssub.s32 %s15, 1
      // Predicated region
      $region13: #{mnist_network_forward.1} parent=11 // pred_check
        %p266 = pneg %p74
      $region14: #{mnist_network_forward.1} parent=11 // pred_check_branch
        %268 = sbr.rel (%p266) target = $region16
      $region15: #{mnist_network_forward.1} parent=11 // pred_region
        _
      $region16: #{mnist_network_forward.1} parent=11 // pred_fallthru
        _
      // Predicated region
      $region17: #{mnist_network_forward.1} parent=11 // pred_check
        %p269 = pneg %p95
      $region18: #{mnist_network_forward.1} parent=11 // pred_check_branch
        %271 = sbr.rel (%p269) target = $region20
      $region19: #{mnist_network_forward.1} parent=11 // pred_region
        _
      $region20: #{mnist_network_forward.1} parent=11 // pred_fallthru
        _
      // Predicated region
      $region21: #{mnist_network_forward.1} parent=11 // pred_check
        %p272 = pneg %p116
      $region22: #{mnist_network_forward.1} parent=11 // pred_check_branch
        %274 = sbr.rel (%p272) target = $region24
      $region23: #{mnist_network_forward.1} parent=11 // pred_region
        _
      $region24: #{mnist_network_forward.1} parent=11 // pred_fallthru
        _
      // Predicated region
      $region25: #{mnist_network_forward.1} parent=11 // pred_check
        %p275 = pneg %p137
      $region26: #{mnist_network_forward.1} parent=11 // pred_check_branch
        %277 = sbr.rel (%p275) target = $region28
      $region27: #{mnist_network_forward.1} parent=11 // pred_region
        _
      $region28: #{mnist_network_forward.1} parent=11 // pred_fallthru
        _
      // Predicated region
      $region29: #{mnist_network_forward.1} parent=11 // pred_check
        %p278 = pneg %p158
      $region30: #{mnist_network_forward.1} parent=11 // pred_check_branch
        %280 = sbr.rel (%p278) target = $region32
      $region31: #{mnist_network_forward.1} parent=11 // pred_region
        _
      $region32: #{mnist_network_forward.1} parent=11 // pred_fallthru
        _
      // Predicated region
      $region33: #{mnist_network_forward.1} parent=11 // pred_check
        %p281 = pneg %p179
      $region34: #{mnist_network_forward.1} parent=11 // pred_check_branch
        %283 = sbr.rel (%p281) target = $region36
      $region35: #{mnist_network_forward.1} parent=11 // pred_region
        _
      $region36: #{mnist_network_forward.1} parent=11 // pred_fallthru
        _
      // Predicated region
      $region37: #{mnist_network_forward.1} parent=11 // pred_check
        %p284 = pneg %p200
      $region38: #{mnist_network_forward.1} parent=11 // pred_check_branch
        %286 = sbr.rel (%p284) target = $region40
      $region39: #{mnist_network_forward.1} parent=11 // pred_region
        _
      $region40: #{mnist_network_forward.1} parent=11 // pred_fallthru
        _
      // Predicated region
      $region41: #{mnist_network_forward.1} parent=11 // pred_check
        %p287 = pneg %p221
      $region42: #{mnist_network_forward.1} parent=11 // pred_check_branch
        %289 = sbr.rel (%p287) target = $region44
      $region43: #{mnist_network_forward.1} parent=11 // pred_region
        _
      $region44: #{mnist_network_forward.1} parent=11 // pred_fallthru
        _
    $region12: #{mnist_network_forward.1} parent=5 // pred_fallthru
      _
    %p290 = scmp.lt.s32.totalorder %s15, 6
    // Predicated region
    $region45: #{mnist_network_forward.1} parent=5 // pred_check
      %p291 = pneg %p290
    $region46: #{mnist_network_forward.1} parent=5 // pred_check_branch
      %293 = sbr.rel (%p291) target = $region48
    $region47: #{mnist_network_forward.1} parent=5 // pred_region
      // Predicated region
      $region49: #{mnist_network_forward.1} parent=47 // pred_check
        %p294 = pneg %p47
      $region50: #{mnist_network_forward.1} parent=47 // pred_check_branch
        %296 = sbr.rel (%p294) target = $region52
      $region51: #{mnist_network_forward.1} parent=47 // pred_region
        %s297 = smul.u32 16, %s23
        %p298 = scmp.lt.s32.totalorder %s297, 31
        %s299 = scalar_select %p298, %s297, 31
        %s300 = smul.addr %s299, 7
        %s301 = smul.addr %s300, 8
        %s302 = scalar_lea.vmem %s0, %s301
        %s303 = smul.u32 16, %s23
      $region52: #{mnist_network_forward.1} parent=47 // pred_fallthru
        _
    $region48: #{mnist_network_forward.1} parent=5 // pred_fallthru
      _
    %p304 = scmp.le.s32.totalorder 1, %s15
    %p305 = scmp.lt.s32.totalorder %s15, 7
    %p306 = pnand %p304, %p305
    %p307 = pneg %p306
    // Predicated region
    $region53: #{mnist_network_forward.1} parent=5 // pred_check
      _
    $region54: #{mnist_network_forward.1} parent=5 // pred_check_branch
      %309 = sbr.rel (%p306) target = $region56
    $region55: #{mnist_network_forward.1} parent=5 // pred_region
      %s310 = ssub.s32 %s15, 1
      %s311 = smul.u32 16, %s25
      %p312 = scmp.lt.s32.totalorder %s311, 31
      %s313 = scalar_select %p312, %s311, 31
      %s314 = smul.addr %s313, 7
      %s315 = smul.addr %s314, 8
      %s316 = scalar_lea.vmem %s0, %s315
      %p317 = pneg %p53
      %p318 = pneg %p50
      %p319 = pneg %p74
      %p320 = pneg %p71
      %p321 = pneg %p95
      %p322 = pneg %p92
      %p323 = pneg %p116
      %p324 = pneg %p113
      %p325 = pneg %p137
      %p326 = pneg %p134
      %p327 = pneg %p158
      %p328 = pneg %p155
      %p329 = pneg %p179
      %p330 = pneg %p176
      %p331 = pneg %p200
      %p332 = pneg %p197
      %p333 = pneg %p221
      %p334 = pneg %p218
      %p335 = pneg %p251
      %p336 = pneg %p248
      %p337 = scmp.eq.s32.totalorder %s24, 2
      %s338 = scalar_select %p337, %s25, 0
      %s339 = smul.u32 16, %s338
      %p340 = scmp.lt.s32.totalorder %s339, 31
      %s341 = scalar_select %p340, %s339, 31
      %s342 = smul.addr %s341, 8
      %s343 = scalar_lea.vmem %s9, %s342
      %s344 = smul.u32 16, %s25
      %p345 = scmp.lt.s32.totalorder %s344, 31
      %s346 = scalar_select %p345, %s344, 31
      %s347 = smul.addr %s346, 7
      %s348 = smul.addr %s347, 8
      %s349 = scalar_lea.vmem %s0, %s348
      %s350 = smul.u32 16, %s25
      %p351 = scmp.eq.s32.totalorder %s24, 2
      %s352 = scalar_select %p351, %s25, 0
      %s353 = smul.u32 16, %s352
      %p354 = scmp.lt.s32.totalorder %s353, 31
      %s355 = scalar_select %p354, %s353, 31
      %s356 = smul.addr %s355, 8
      %s357 = scalar_lea.vmem %s9, %s356
      %p358 = scmp.eq.s32.totalorder %s24, 2
      %s359 = scalar_select %p358, %s25, 0
      %s360 = smul.u32 16, %s359
      %p362 = scmp.eq.s32.totalorder %s24, 0
      %p363 = scmp.eq.s32.totalorder %s25, 0
      %p364 = pnand %p362, %p363
      %p365 = pneg %p364
      // Predicated region
      $region57: #{mnist_network_forward.1} parent=55 // pred_check
        _
      $region58: #{mnist_network_forward.1} parent=55 // pred_check_branch
        %367 = sbr.rel (%p364) target = $region60
      $region59: #{mnist_network_forward.1} parent=55 // pred_region
        %v368 = vlaneseq
        %vm369 = vcmp.ge.s32.totalorder %v368, 0
        %vm370 = vcmp.lt.s32.totalorder %v368, 256
        %vm371 = vmand %vm369, %vm370
        %372 = vst.msk [vmem:[#allocation2] sm:$0x3] %vm371, 0.0
        %373 = vst.msk [vmem:[#allocation3] sm:$0x3] %vm371, 0.0
        %374 = vst [vmem:[#allocation4] sm:$0x1] 0.0
        %375 = vst [vmem:[#allocation5] sm:$0x1] 0.0
      $region60: #{mnist_network_forward.1} parent=55 // pred_fallthru
        _
      %v376 = vlaneseq
      %v377 = vshrl.u32 %v376, 7
      %v378 = vadd.s32 %v377, 8
      %v379 = vadd.s32 %v377, 16
      %v380 = vadd.s32 %v377, 24
      %v381 = vadd.s32 %v377, 32
      %v382 = vadd.s32 %v377, 40
      %v383 = vadd.s32 %v377, 48
      %v384 = vadd.s32 %v377, 56
      %v385 = vadd.s32 %v377, 64
      %v386 = vadd.s32 %v377, 72
      %v387 = vadd.s32 %v377, 80
      %v388 = vadd.s32 %v377, 88
      %v389 = vadd.s32 %v377, 96
      %v390 = vadd.s32 %v377, 104
      %v391 = vadd.s32 %v377, 112
      %v392 = vadd.s32 %v377, 120
      %s393 = smul.u32 %s25, 128
      %v394 = vstv %s393
      %v395 = vadd.s32 %v377, %v394
      %v396 = vadd.s32 %v378, %v394
      %v397 = vadd.s32 %v379, %v394
      %v398 = vadd.s32 %v380, %v394
      %v399 = vadd.s32 %v381, %v394
      %v400 = vadd.s32 %v382, %v394
      %v401 = vadd.s32 %v383, %v394
      %v402 = vadd.s32 %v384, %v394
      %v403 = vadd.s32 %v385, %v394
      %v404 = vadd.s32 %v386, %v394
      %v405 = vadd.s32 %v387, %v394
      %v406 = vadd.s32 %v388, %v394
      %v407 = vadd.s32 %v389, %v394
      %v408 = vadd.s32 %v390, %v394
      %v409 = vadd.s32 %v391, %v394
      %v410 = vadd.s32 %v392, %v394
      %vm411 = vcmp.lt.s32.totalorder %v395, 256
      %vm412 = vcmp.lt.s32.totalorder %v396, 256
      %vm413 = vcmp.lt.s32.totalorder %v397, 256
      %vm414 = vcmp.lt.s32.totalorder %v398, 256
      %vm415 = vcmp.lt.s32.totalorder %v399, 256
      %vm416 = vcmp.lt.s32.totalorder %v400, 256
      %vm417 = vcmp.lt.s32.totalorder %v401, 256
      %vm418 = vcmp.lt.s32.totalorder %v402, 256
      %vm419 = vcmp.lt.s32.totalorder %v403, 256
      %vm420 = vcmp.lt.s32.totalorder %v404, 256
      %vm421 = vcmp.lt.s32.totalorder %v405, 256
      %vm422 = vcmp.lt.s32.totalorder %v406, 256
      %vm423 = vcmp.lt.s32.totalorder %v407, 256
      %vm424 = vcmp.lt.s32.totalorder %v408, 256
      %vm425 = vcmp.lt.s32.totalorder %v409, 256
      %vm426 = vcmp.lt.s32.totalorder %v410, 256
      %v427 = vld [vmem:[%s349] sm:$0xff]
      %v428 = vld [vmem:[%s349 + $0x8] sm:$0xff]
      %v429 = vld [vmem:[%s349 + $0x10] sm:$0xff]
      %v430 = vld [vmem:[%s349 + $0x18] sm:$0xff]
      %v431 = vld [vmem:[%s349 + $0x20] sm:$0xff]
      %v432 = vld [vmem:[%s349 + $0x28] sm:$0xff]
      %v433 = vld [vmem:[%s349 + $0x30] sm:$0xff]
      %v434 = vld [vmem:[%s349 + $0x38] sm:$0xff]
      %v435 = vld [vmem:[%s349 + $0x40] sm:$0xff]
      %v436 = vld [vmem:[%s349 + $0x48] sm:$0xff]
      %v437 = vld [vmem:[%s349 + $0x50] sm:$0xff]
      %v438 = vld [vmem:[%s349 + $0x58] sm:$0xff]
      %v439 = vld [vmem:[%s349 + $0x60] sm:$0xff]
      %v440 = vld [vmem:[%s349 + $0x68] sm:$0xff]
      %v441 = vld [vmem:[%s349 + $0x70] sm:$0xff]
      %v442 = vld [vmem:[%s349 + $0x78] sm:$0xff]
      %v443 = vld [vmem:[%s349 + $0x80] sm:$0xff]
      %v444 = vld [vmem:[%s349 + $0x88] sm:$0xff]
      %v445 = vld [vmem:[%s349 + $0x90] sm:$0xff]
      %v446 = vld [vmem:[%s349 + $0x98] sm:$0xff]
      %v447 = vld [vmem:[%s349 + $0xa0] sm:$0xff]
      %v448 = vld [vmem:[%s349 + $0xa8] sm:$0xff]
      %v449 = vld [vmem:[%s349 + $0xb0] sm:$0xff]
      %v450 = vld [vmem:[%s349 + $0xb8] sm:$0xff]
      %v451 = vld [vmem:[%s349 + $0xc0] sm:$0xff]
      %v452 = vld [vmem:[%s349 + $0xc8] sm:$0xff]
      %v453 = vld [vmem:[%s349 + $0xd0] sm:$0xff]
      %v454 = vld [vmem:[%s349 + $0xd8] sm:$0xff]
      %v455 = vld [vmem:[%s349 + $0xe0] sm:$0xff]
      %v456 = vld [vmem:[%s349 + $0xe8] sm:$0xff]
      %v457 = vld [vmem:[%s349 + $0xf0] sm:$0xff]
      %v458 = vld [vmem:[%s349 + $0xf8] sm:$0xff]
      %v459 = vld [vmem:[%s349 + $0x100] sm:$0xff]
      %v460 = vld [vmem:[%s349 + $0x108] sm:$0xff]
      %v461 = vld [vmem:[%s349 + $0x110] sm:$0xff]
      %v462 = vld [vmem:[%s349 + $0x118] sm:$0xff]
      %v463 = vld [vmem:[%s349 + $0x120] sm:$0xff]
      %v464 = vld [vmem:[%s349 + $0x128] sm:$0xff]
      %v465 = vld [vmem:[%s349 + $0x130] sm:$0xff]
      %v466 = vld [vmem:[%s349 + $0x138] sm:$0xff]
      %v467 = vld [vmem:[%s349 + $0x140] sm:$0xff]
      %v468 = vld [vmem:[%s349 + $0x148] sm:$0xff]
      %v469 = vld [vmem:[%s349 + $0x150] sm:$0xff]
      %v470 = vld [vmem:[%s349 + $0x158] sm:$0xff]
      %v471 = vld [vmem:[%s349 + $0x160] sm:$0xff]
      %v472 = vld [vmem:[%s349 + $0x168] sm:$0xff]
      %v473 = vld [vmem:[%s349 + $0x170] sm:$0xff]
      %v474 = vld [vmem:[%s349 + $0x178] sm:$0xff]
      %v475 = vld [vmem:[%s349 + $0x180] sm:$0xff]
      %v476 = vld [vmem:[%s349 + $0x188] sm:$0xff]
      %v477 = vld [vmem:[%s349 + $0x190] sm:$0xff]
      %v478 = vld [vmem:[%s349 + $0x198] sm:$0xff]
      %v479 = vld [vmem:[%s349 + $0x1a0] sm:$0xff]
      %v480 = vld [vmem:[%s349 + $0x1a8] sm:$0xff]
      %v481 = vld [vmem:[%s349 + $0x1b0] sm:$0xff]
      %v482 = vld [vmem:[%s349 + $0x1b8] sm:$0xff]
      %v483 = vld [vmem:[%s349 + $0x1c0] sm:$0xff]
      %v484 = vld [vmem:[%s349 + $0x1c8] sm:$0xff]
      %v485 = vld [vmem:[%s349 + $0x1d0] sm:$0xff]
      %v486 = vld [vmem:[%s349 + $0x1d8] sm:$0xff]
      %v487 = vld [vmem:[%s349 + $0x1e0] sm:$0xff]
      %v488 = vld [vmem:[%s349 + $0x1e8] sm:$0xff]
      %v489 = vld [vmem:[%s349 + $0x1f0] sm:$0xff]
      %v490 = vld [vmem:[%s349 + $0x1f8] sm:$0xff]
      %v491 = vld [vmem:[%s349 + $0x200] sm:$0xff]
      %v492 = vld [vmem:[%s349 + $0x208] sm:$0xff]
      %v493 = vld [vmem:[%s349 + $0x210] sm:$0xff]
      %v494 = vld [vmem:[%s349 + $0x218] sm:$0xff]
      %v495 = vld [vmem:[%s349 + $0x220] sm:$0xff]
      %v496 = vld [vmem:[%s349 + $0x228] sm:$0xff]
      %v497 = vld [vmem:[%s349 + $0x230] sm:$0xff]
      %v498 = vld [vmem:[%s349 + $0x238] sm:$0xff]
      %v499 = vld [vmem:[%s349 + $0x240] sm:$0xff]
      %v500 = vld [vmem:[%s349 + $0x248] sm:$0xff]
      %v501 = vld [vmem:[%s349 + $0x250] sm:$0xff]
      %v502 = vld [vmem:[%s349 + $0x258] sm:$0xff]
      %v503 = vld [vmem:[%s349 + $0x260] sm:$0xff]
      %v504 = vld [vmem:[%s349 + $0x268] sm:$0xff]
      %v505 = vld [vmem:[%s349 + $0x270] sm:$0xff]
      %v506 = vld [vmem:[%s349 + $0x278] sm:$0xff]
      %v507 = vld [vmem:[%s349 + $0x280] sm:$0xff]
      %v508 = vld [vmem:[%s349 + $0x288] sm:$0xff]
      %v509 = vld [vmem:[%s349 + $0x290] sm:$0xff]
      %v510 = vld [vmem:[%s349 + $0x298] sm:$0xff]
      %v511 = vld [vmem:[%s349 + $0x2a0] sm:$0xff]
      %v512 = vld [vmem:[%s349 + $0x2a8] sm:$0xff]
      %v513 = vld [vmem:[%s349 + $0x2b0] sm:$0xff]
      %v514 = vld [vmem:[%s349 + $0x2b8] sm:$0xff]
      %v515 = vld [vmem:[%s349 + $0x2c0] sm:$0xff]
      %v516 = vld [vmem:[%s349 + $0x2c8] sm:$0xff]
      %v517 = vld [vmem:[%s349 + $0x2d0] sm:$0xff]
      %v518 = vld [vmem:[%s349 + $0x2d8] sm:$0xff]
      %v519 = vld [vmem:[%s349 + $0x2e0] sm:$0xff]
      %v520 = vld [vmem:[%s349 + $0x2e8] sm:$0xff]
      %v521 = vld [vmem:[%s349 + $0x2f0] sm:$0xff]
      %v522 = vld [vmem:[%s349 + $0x2f8] sm:$0xff]
      %v523 = vld [vmem:[%s349 + $0x300] sm:$0xff]
      %v524 = vld [vmem:[%s349 + $0x308] sm:$0xff]
      %v525 = vld [vmem:[%s349 + $0x310] sm:$0xff]
      %v526 = vld [vmem:[%s349 + $0x318] sm:$0xff]
      %v527 = vld [vmem:[%s349 + $0x320] sm:$0xff]
      %v528 = vld [vmem:[%s349 + $0x328] sm:$0xff]
      %v529 = vld [vmem:[%s349 + $0x330] sm:$0xff]
      %v530 = vld [vmem:[%s349 + $0x338] sm:$0xff]
      %v531 = vld [vmem:[%s349 + $0x340] sm:$0xff]
      %v532 = vld [vmem:[%s349 + $0x348] sm:$0xff]
      %v533 = vld [vmem:[%s349 + $0x350] sm:$0xff]
      %v534 = vld [vmem:[%s349 + $0x358] sm:$0xff]
      %v535 = vld [vmem:[%s349 + $0x360] sm:$0xff]
      %v536 = vld [vmem:[%s349 + $0x368] sm:$0xff]
      %v537 = vld [vmem:[%s349 + $0x370] sm:$0xff]
      %v538 = vld [vmem:[%s349 + $0x378] sm:$0xff]
      %v539 = vpack.c.bf16 %v434, %v427
      %v540 = vpack.c.bf16 %v435, %v428
      %v541 = vpack.c.bf16 %v436, %v429
      %v542 = vpack.c.bf16 %v437, %v430
      %v543 = vpack.c.bf16 %v438, %v431
      %v544 = vpack.c.bf16 %v439, %v432
      %v545 = vpack.c.bf16 %v440, %v433
      %v546 = vpack.c.bf16 %v448, %v441
      %v547 = vpack.c.bf16 %v449, %v442
      %v548 = vpack.c.bf16 %v450, %v443
      %v549 = vpack.c.bf16 %v451, %v444
      %v550 = vpack.c.bf16 %v452, %v445
      %v551 = vpack.c.bf16 %v453, %v446
      %v552 = vpack.c.bf16 %v454, %v447
      %v553 = vpack.c.bf16 %v462, %v455
      %v554 = vpack.c.bf16 %v463, %v456
      %v555 = vpack.c.bf16 %v464, %v457
      %v556 = vpack.c.bf16 %v465, %v458
      %v557 = vpack.c.bf16 %v466, %v459
      %v558 = vpack.c.bf16 %v467, %v460
      %v559 = vpack.c.bf16 %v468, %v461
      %v560 = vpack.c.bf16 %v476, %v469
      %v561 = vpack.c.bf16 %v477, %v470
      %v562 = vpack.c.bf16 %v478, %v471
      %v563 = vpack.c.bf16 %v479, %v472
      %v564 = vpack.c.bf16 %v480, %v473
      %v565 = vpack.c.bf16 %v481, %v474
      %v566 = vpack.c.bf16 %v482, %v475
      %v567 = vpack.c.bf16 %v490, %v483
      %v568 = vpack.c.bf16 %v491, %v484
      %v569 = vpack.c.bf16 %v492, %v485
      %v570 = vpack.c.bf16 %v493, %v486
      %v571 = vpack.c.bf16 %v494, %v487
      %v572 = vpack.c.bf16 %v495, %v488
      %v573 = vpack.c.bf16 %v496, %v489
      %v574 = vpack.c.bf16 %v504, %v497
      %v575 = vpack.c.bf16 %v505, %v498
      %v576 = vpack.c.bf16 %v506, %v499
      %v577 = vpack.c.bf16 %v507, %v500
      %v578 = vpack.c.bf16 %v508, %v501
      %v579 = vpack.c.bf16 %v509, %v502
      %v580 = vpack.c.bf16 %v510, %v503
      %v581 = vpack.c.bf16 %v518, %v511
      %v582 = vpack.c.bf16 %v519, %v512
      %v583 = vpack.c.bf16 %v520, %v513
      %v584 = vpack.c.bf16 %v521, %v514
      %v585 = vpack.c.bf16 %v522, %v515
      %v586 = vpack.c.bf16 %v523, %v516
      %v587 = vpack.c.bf16 %v524, %v517
      %v588 = vpack.c.bf16 %v532, %v525
      %v589 = vpack.c.bf16 %v533, %v526
      %v590 = vpack.c.bf16 %v534, %v527
      %v591 = vpack.c.bf16 %v535, %v528
      %v592 = vpack.c.bf16 %v536, %v529
      %v593 = vpack.c.bf16 %v537, %v530
      %v594 = vpack.c.bf16 %v538, %v531
      %v595 = vld [vmem:[%s1] sm:$0xff]
      %v596 = vld [vmem:[%s1 + $0x8] sm:$0xff]
      %v597 = vld [vmem:[%s1 + $0x10] sm:$0xff]
      %v598 = vld [vmem:[%s1 + $0x18] sm:$0xff]
      %v599 = vld [vmem:[%s1 + $0x20] sm:$0xff]
      %v600 = vld [vmem:[%s1 + $0x28] sm:$0xff]
      %v601 = vld [vmem:[%s1 + $0x30] sm:$0xff]
      %v602 = vld [vmem:[%s1 + $0x38] sm:$0xff]
      %v603 = vld [vmem:[%s1 + $0x40] sm:$0xff]
      %v604 = vld [vmem:[%s1 + $0x48] sm:$0xff]
      %v605 = vld [vmem:[%s1 + $0x50] sm:$0xff]
      %v606 = vld [vmem:[%s1 + $0x58] sm:$0xff]
      %v607 = vld [vmem:[%s1 + $0x60] sm:$0xff]
      %v608 = vld [vmem:[%s1 + $0x68] sm:$0xff]
      %v609 = vld [vmem:[%s1 + $0x70] sm:$0xff]
      %v610 = vld [vmem:[%s1 + $0x78] sm:$0xff]
      %v611 = vld [vmem:[%s1 + $0x80] sm:$0xff]
      %v612 = vld [vmem:[%s1 + $0x88] sm:$0xff]
      %v613 = vld [vmem:[%s1 + $0x90] sm:$0xff]
      %v614 = vld [vmem:[%s1 + $0x98] sm:$0xff]
      %v615 = vld [vmem:[%s1 + $0xa0] sm:$0xff]
      %v616 = vld [vmem:[%s1 + $0xa8] sm:$0xff]
      %v617 = vld [vmem:[%s1 + $0xb0] sm:$0xff]
      %v618 = vld [vmem:[%s1 + $0xb8] sm:$0xff]
      %v619 = vld [vmem:[%s1 + $0xc0] sm:$0xff]
      %v620 = vld [vmem:[%s1 + $0xc8] sm:$0xff]
      %v621 = vld [vmem:[%s1 + $0xd0] sm:$0xff]
      %v622 = vld [vmem:[%s1 + $0xd8] sm:$0xff]
      %v623 = vld [vmem:[%s1 + $0xe0] sm:$0xff]
      %v624 = vld [vmem:[%s1 + $0xe8] sm:$0xff]
      %v625 = vld [vmem:[%s1 + $0xf0] sm:$0xff]
      %v626 = vld [vmem:[%s1 + $0xf8] sm:$0xff]
      %v627 = vld [vmem:[%s1 + $0x100] sm:$0xff]
      %v628 = vld [vmem:[%s1 + $0x108] sm:$0xff]
      %v629 = vld [vmem:[%s1 + $0x110] sm:$0xff]
      %v630 = vld [vmem:[%s1 + $0x118] sm:$0xff]
      %v631 = vld [vmem:[%s1 + $0x120] sm:$0xff]
      %v632 = vld [vmem:[%s1 + $0x128] sm:$0xff]
      %v633 = vld [vmem:[%s1 + $0x130] sm:$0xff]
      %v634 = vld [vmem:[%s1 + $0x138] sm:$0xff]
      %v635 = vld [vmem:[%s1 + $0x140] sm:$0xff]
      %v636 = vld [vmem:[%s1 + $0x148] sm:$0xff]
      %v637 = vld [vmem:[%s1 + $0x150] sm:$0xff]
      %v638 = vld [vmem:[%s1 + $0x158] sm:$0xff]
      %v639 = vld [vmem:[%s1 + $0x160] sm:$0xff]
      %v640 = vld [vmem:[%s1 + $0x168] sm:$0xff]
      %v641 = vld [vmem:[%s1 + $0x170] sm:$0xff]
      %v642 = vld [vmem:[%s1 + $0x178] sm:$0xff]
      %v643 = vld [vmem:[%s1 + $0x180] sm:$0xff]
      %v644 = vld [vmem:[%s1 + $0x188] sm:$0xff]
      %v645 = vld [vmem:[%s1 + $0x190] sm:$0xff]
      %v646 = vld [vmem:[%s1 + $0x198] sm:$0xff]
      %v647 = vld [vmem:[%s1 + $0x1a0] sm:$0xff]
      %v648 = vld [vmem:[%s1 + $0x1a8] sm:$0xff]
      %v649 = vld [vmem:[%s1 + $0x1b0] sm:$0xff]
      %v650 = vld [vmem:[%s1 + $0x1b8] sm:$0xff]
      %v651 = vld [vmem:[%s1 + $0x1c0] sm:$0xff]
      %v652 = vld [vmem:[%s1 + $0x1c8] sm:$0xff]
      %v653 = vld [vmem:[%s1 + $0x1d0] sm:$0xff]
      %v654 = vld [vmem:[%s1 + $0x1d8] sm:$0xff]
      %v655 = vld [vmem:[%s1 + $0x1e0] sm:$0xff]
      %v656 = vld [vmem:[%s1 + $0x1e8] sm:$0xff]
      %v657 = vld [vmem:[%s1 + $0x1f0] sm:$0xff]
      %v658 = vld [vmem:[%s1 + $0x1f8] sm:$0xff]
      %v659 = vld [vmem:[%s1 + $0x200] sm:$0xff]
      %v660 = vld [vmem:[%s1 + $0x208] sm:$0xff]
      %v661 = vld [vmem:[%s1 + $0x210] sm:$0xff]
      %v662 = vld [vmem:[%s1 + $0x218] sm:$0xff]
      %v663 = vld [vmem:[%s1 + $0x220] sm:$0xff]
      %v664 = vld [vmem:[%s1 + $0x228] sm:$0xff]
      %v665 = vld [vmem:[%s1 + $0x230] sm:$0xff]
      %v666 = vld [vmem:[%s1 + $0x238] sm:$0xff]
      %v667 = vld [vmem:[%s1 + $0x240] sm:$0xff]
      %v668 = vld [vmem:[%s1 + $0x248] sm:$0xff]
      %v669 = vld [vmem:[%s1 + $0x250] sm:$0xff]
      %v670 = vld [vmem:[%s1 + $0x258] sm:$0xff]
      %v671 = vld [vmem:[%s1 + $0x260] sm:$0xff]
      %v672 = vld [vmem:[%s1 + $0x268] sm:$0xff]
      %v673 = vld [vmem:[%s1 + $0x270] sm:$0xff]
      %v674 = vld [vmem:[%s1 + $0x278] sm:$0xff]
      %v675 = vld [vmem:[%s1 + $0x280] sm:$0xff]
      %v676 = vld [vmem:[%s1 + $0x288] sm:$0xff]
      %v677 = vld [vmem:[%s1 + $0x290] sm:$0xff]
      %v678 = vld [vmem:[%s1 + $0x298] sm:$0xff]
      %v679 = vld [vmem:[%s1 + $0x2a0] sm:$0xff]
      %v680 = vld [vmem:[%s1 + $0x2a8] sm:$0xff]
      %v681 = vld [vmem:[%s1 + $0x2b0] sm:$0xff]
      %v682 = vld [vmem:[%s1 + $0x2b8] sm:$0xff]
      %v683 = vld [vmem:[%s1 + $0x2c0] sm:$0xff]
      %v684 = vld [vmem:[%s1 + $0x2c8] sm:$0xff]
      %v685 = vld [vmem:[%s1 + $0x2d0] sm:$0xff]
      %v686 = vld [vmem:[%s1 + $0x2d8] sm:$0xff]
      %v687 = vld [vmem:[%s1 + $0x2e0] sm:$0xff]
      %v688 = vld [vmem:[%s1 + $0x2e8] sm:$0xff]
      %v689 = vld [vmem:[%s1 + $0x2f0] sm:$0xff]
      %v690 = vld [vmem:[%s1 + $0x2f8] sm:$0xff]
      %v691 = vld [vmem:[%s1 + $0x300] sm:$0xff]
      %v692 = vld [vmem:[%s1 + $0x308] sm:$0xff]
      %v791 = vunpack.c.l.b16 %v595
      %v792 = vunpack.c.h.b16 %v595
      %v793 = vunpack.c.l.b16 %v596
      %v794 = vunpack.c.h.b16 %v596
      %v795 = vunpack.c.l.b16 %v597
      %v796 = vunpack.c.h.b16 %v597
      %v797 = vunpack.c.l.b16 %v598
      %v798 = vunpack.c.h.b16 %v598
      %v799 = vunpack.c.l.b16 %v599
      %v800 = vunpack.c.h.b16 %v599
      %v801 = vunpack.c.l.b16 %v600
      %v802 = vunpack.c.h.b16 %v600
      %v803 = vunpack.c.l.b16 %v601
      %v804 = vunpack.c.h.b16 %v601
      %v805 = vunpack.c.l.b16 %v602
      %v806 = vunpack.c.h.b16 %v602
      %v807 = vunpack.c.l.b16 %v603
      %v808 = vunpack.c.h.b16 %v603
      %v809 = vunpack.c.l.b16 %v604
      %v810 = vunpack.c.h.b16 %v604
      %v811 = vunpack.c.l.b16 %v605
      %v812 = vunpack.c.h.b16 %v605
      %v813 = vunpack.c.l.b16 %v606
      %v814 = vunpack.c.h.b16 %v606
      %v815 = vunpack.c.l.b16 %v607
      %v816 = vunpack.c.h.b16 %v607
      %v817 = vunpack.c.l.b16 %v608
      %v818 = vunpack.c.h.b16 %v608
      %v819 = vunpack.c.l.b16 %v609
      %v820 = vunpack.c.h.b16 %v609
      %v821 = vunpack.c.l.b16 %v610
      %v822 = vunpack.c.h.b16 %v610
      %v823 = vunpack.c.l.b16 %v611
      %v824 = vunpack.c.h.b16 %v611
      %v825 = vunpack.c.l.b16 %v612
      %v826 = vunpack.c.h.b16 %v612
      %v827 = vunpack.c.l.b16 %v613
      %v828 = vunpack.c.h.b16 %v613
      %v829 = vunpack.c.l.b16 %v614
      %v830 = vunpack.c.h.b16 %v614
      %v831 = vunpack.c.l.b16 %v615
      %v832 = vunpack.c.h.b16 %v615
      %v833 = vunpack.c.l.b16 %v616
      %v834 = vunpack.c.h.b16 %v616
      %v835 = vunpack.c.l.b16 %v617
      %v836 = vunpack.c.h.b16 %v617
      %v837 = vunpack.c.l.b16 %v618
      %v838 = vunpack.c.h.b16 %v618
      %v839 = vunpack.c.l.b16 %v619
      %v840 = vunpack.c.h.b16 %v619
      %v841 = vunpack.c.l.b16 %v620
      %v842 = vunpack.c.h.b16 %v620
      %v843 = vunpack.c.l.b16 %v621
      %v844 = vunpack.c.h.b16 %v621
      %v845 = vunpack.c.l.b16 %v622
      %v846 = vunpack.c.h.b16 %v622
      %v847 = vunpack.c.l.b16 %v623
      %v848 = vunpack.c.h.b16 %v623
      %v849 = vunpack.c.l.b16 %v624
      %v850 = vunpack.c.h.b16 %v624
      %v851 = vunpack.c.l.b16 %v625
      %v852 = vunpack.c.h.b16 %v625
      %v853 = vunpack.c.l.b16 %v626
      %v854 = vunpack.c.h.b16 %v626
      %v855 = vunpack.c.l.b16 %v627
      %v856 = vunpack.c.h.b16 %v627
      %v857 = vunpack.c.l.b16 %v628
      %v858 = vunpack.c.h.b16 %v628
      %v859 = vunpack.c.l.b16 %v629
      %v860 = vunpack.c.h.b16 %v629
      %v861 = vunpack.c.l.b16 %v630
      %v862 = vunpack.c.h.b16 %v630
      %v863 = vunpack.c.l.b16 %v631
      %v864 = vunpack.c.h.b16 %v631
      %v865 = vunpack.c.l.b16 %v632
      %v866 = vunpack.c.h.b16 %v632
      %v867 = vunpack.c.l.b16 %v633
      %v868 = vunpack.c.h.b16 %v633
      %v869 = vunpack.c.l.b16 %v634
      %v870 = vunpack.c.h.b16 %v634
      %v871 = vunpack.c.l.b16 %v635
      %v872 = vunpack.c.h.b16 %v635
      %v873 = vunpack.c.l.b16 %v636
      %v874 = vunpack.c.h.b16 %v636
      %v875 = vunpack.c.l.b16 %v637
      %v876 = vunpack.c.h.b16 %v637
      %v877 = vunpack.c.l.b16 %v638
      %v878 = vunpack.c.h.b16 %v638
      %v879 = vunpack.c.l.b16 %v639
      %v880 = vunpack.c.h.b16 %v639
      %v881 = vunpack.c.l.b16 %v640
      %v882 = vunpack.c.h.b16 %v640
      %v883 = vunpack.c.l.b16 %v641
      %v884 = vunpack.c.h.b16 %v641
      %v885 = vunpack.c.l.b16 %v642
      %v886 = vunpack.c.h.b16 %v642
      %v887 = vunpack.c.l.b16 %v643
      %v888 = vunpack.c.h.b16 %v643
      %v889 = vunpack.c.l.b16 %v644
      %v890 = vunpack.c.h.b16 %v644
      %v891 = vunpack.c.l.b16 %v645
      %v892 = vunpack.c.h.b16 %v645
      %v893 = vunpack.c.l.b16 %v646
      %v894 = vunpack.c.h.b16 %v646
      %v895 = vunpack.c.l.b16 %v647
      %v896 = vunpack.c.h.b16 %v647
      %v897 = vunpack.c.l.b16 %v648
      %v898 = vunpack.c.h.b16 %v648
      %v899 = vunpack.c.l.b16 %v649
      %v900 = vunpack.c.h.b16 %v649
      %v901 = vunpack.c.l.b16 %v650
      %v902 = vunpack.c.h.b16 %v650
      %v903 = vunpack.c.l.b16 %v651
      %v904 = vunpack.c.h.b16 %v651
      %v905 = vunpack.c.l.b16 %v652
      %v906 = vunpack.c.h.b16 %v652
      %v907 = vunpack.c.l.b16 %v653
      %v908 = vunpack.c.h.b16 %v653
      %v909 = vunpack.c.l.b16 %v654
      %v910 = vunpack.c.h.b16 %v654
      %v911 = vunpack.c.l.b16 %v655
      %v912 = vunpack.c.h.b16 %v655
      %v913 = vunpack.c.l.b16 %v656
      %v914 = vunpack.c.h.b16 %v656
      %v915 = vunpack.c.l.b16 %v657
      %v916 = vunpack.c.h.b16 %v657
      %v917 = vunpack.c.l.b16 %v658
      %v918 = vunpack.c.h.b16 %v658
      %v919 = vunpack.c.l.b16 %v659
      %v920 = vunpack.c.h.b16 %v659
      %v921 = vunpack.c.l.b16 %v660
      %v922 = vunpack.c.h.b16 %v660
      %v923 = vunpack.c.l.b16 %v661
      %v924 = vunpack.c.h.b16 %v661
      %v925 = vunpack.c.l.b16 %v662
      %v926 = vunpack.c.h.b16 %v662
      %v927 = vunpack.c.l.b16 %v663
      %v928 = vunpack.c.h.b16 %v663
      %v929 = vunpack.c.l.b16 %v664
      %v930 = vunpack.c.h.b16 %v664
      %v931 = vunpack.c.l.b16 %v665
      %v932 = vunpack.c.h.b16 %v665
      %v933 = vunpack.c.l.b16 %v666
      %v934 = vunpack.c.h.b16 %v666
      %v935 = vunpack.c.l.b16 %v667
      %v936 = vunpack.c.h.b16 %v667
      %v937 = vunpack.c.l.b16 %v668
      %v938 = vunpack.c.h.b16 %v668
      %v939 = vunpack.c.l.b16 %v669
      %v940 = vunpack.c.h.b16 %v669
      %v941 = vunpack.c.l.b16 %v670
      %v942 = vunpack.c.h.b16 %v670
      %v943 = vunpack.c.l.b16 %v671
      %v944 = vunpack.c.h.b16 %v671
      %v945 = vunpack.c.l.b16 %v672
      %v946 = vunpack.c.h.b16 %v672
      %v947 = vunpack.c.l.b16 %v673
      %v948 = vunpack.c.h.b16 %v673
      %v949 = vunpack.c.l.b16 %v674
      %v950 = vunpack.c.h.b16 %v674
      %v951 = vunpack.c.l.b16 %v675
      %v952 = vunpack.c.h.b16 %v675
      %v953 = vunpack.c.l.b16 %v676
      %v954 = vunpack.c.h.b16 %v676
      %v955 = vunpack.c.l.b16 %v677
      %v956 = vunpack.c.h.b16 %v677
      %v957 = vunpack.c.l.b16 %v678
      %v958 = vunpack.c.h.b16 %v678
      %v959 = vunpack.c.l.b16 %v679
      %v960 = vunpack.c.h.b16 %v679
      %v961 = vunpack.c.l.b16 %v680
      %v962 = vunpack.c.h.b16 %v680
      %v963 = vunpack.c.l.b16 %v681
      %v964 = vunpack.c.h.b16 %v681
      %v965 = vunpack.c.l.b16 %v682
      %v966 = vunpack.c.h.b16 %v682
      %v967 = vunpack.c.l.b16 %v683
      %v968 = vunpack.c.h.b16 %v683
      %v969 = vunpack.c.l.b16 %v684
      %v970 = vunpack.c.h.b16 %v684
      %v971 = vunpack.c.l.b16 %v685
      %v972 = vunpack.c.h.b16 %v685
      %v973 = vunpack.c.l.b16 %v686
      %v974 = vunpack.c.h.b16 %v686
      %v975 = vunpack.c.l.b16 %v687
      %v976 = vunpack.c.h.b16 %v687
      %v977 = vunpack.c.l.b16 %v688
      %v978 = vunpack.c.h.b16 %v688
      %v979 = vunpack.c.l.b16 %v689
      %v980 = vunpack.c.h.b16 %v689
      %v981 = vunpack.c.l.b16 %v690
      %v982 = vunpack.c.h.b16 %v690
      %v983 = vunpack.c.l.b16 %v691
      %v984 = vunpack.c.h.b16 %v691
      %v985 = vunpack.c.l.b16 %v692
      %v986 = vunpack.c.h.b16 %v692
      %v987 = vpack.c.b16 %v793, %v791
      %v988 = vpack.c.b16 %v794, %v792
      %v989 = vpack.c.b16 %v797, %v795
      %v990 = vpack.c.b16 %v798, %v796
      %v991 = vpack.c.b16 %v801, %v799
      %v992 = vpack.c.b16 %v802, %v800
      %v993 = vpack.c.b16 %v805, %v803
      %v994 = vpack.c.b16 %v806, %v804
      %v995 = vpack.c.b16 %v809, %v807
      %v996 = vpack.c.b16 %v810, %v808
      %v997 = vpack.c.b16 %v813, %v811
      %v998 = vpack.c.b16 %v814, %v812
      %v999 = vpack.c.b16 %v817, %v815
      %v1000 = vpack.c.b16 %v818, %v816
      %v1001 = vpack.c.b16 %v821, %v819
      %v1002 = vpack.c.b16 %v822, %v820
      %v1003 = vpack.c.b16 %v825, %v823
      %v1004 = vpack.c.b16 %v826, %v824
      %v1005 = vpack.c.b16 %v829, %v827
      %v1006 = vpack.c.b16 %v830, %v828
      %v1007 = vpack.c.b16 %v833, %v831
      %v1008 = vpack.c.b16 %v834, %v832
      %v1009 = vpack.c.b16 %v837, %v835
      %v1010 = vpack.c.b16 %v838, %v836
      %v1011 = vpack.c.b16 %v841, %v839
      %v1012 = vpack.c.b16 %v842, %v840
      %v1013 = vpack.c.b16 %v845, %v843
      %v1014 = vpack.c.b16 %v846, %v844
      %v1015 = vpack.c.b16 %v849, %v847
      %v1016 = vpack.c.b16 %v850, %v848
      %v1017 = vpack.c.b16 %v853, %v851
      %v1018 = vpack.c.b16 %v854, %v852
      %v1019 = vpack.c.b16 %v857, %v855
      %v1020 = vpack.c.b16 %v858, %v856
      %v1021 = vpack.c.b16 %v861, %v859
      %v1022 = vpack.c.b16 %v862, %v860
      %v1023 = vpack.c.b16 %v865, %v863
      %v1024 = vpack.c.b16 %v866, %v864
      %v1025 = vpack.c.b16 %v869, %v867
      %v1026 = vpack.c.b16 %v870, %v868
      %v1027 = vpack.c.b16 %v873, %v871
      %v1028 = vpack.c.b16 %v874, %v872
      %v1029 = vpack.c.b16 %v877, %v875
      %v1030 = vpack.c.b16 %v878, %v876
      %v1031 = vpack.c.b16 %v881, %v879
      %v1032 = vpack.c.b16 %v882, %v880
      %v1033 = vpack.c.b16 %v885, %v883
      %v1034 = vpack.c.b16 %v886, %v884
      %v1035 = vpack.c.b16 %v889, %v887
      %v1036 = vpack.c.b16 %v890, %v888
      %v1037 = vpack.c.b16 %v893, %v891
      %v1038 = vpack.c.b16 %v894, %v892
      %v1039 = vpack.c.b16 %v897, %v895
      %v1040 = vpack.c.b16 %v898, %v896
      %v1041 = vpack.c.b16 %v901, %v899
      %v1042 = vpack.c.b16 %v902, %v900
      %v1043 = vpack.c.b16 %v905, %v903
      %v1044 = vpack.c.b16 %v906, %v904
      %v1045 = vpack.c.b16 %v909, %v907
      %v1046 = vpack.c.b16 %v910, %v908
      %v1047 = vpack.c.b16 %v913, %v911
      %v1048 = vpack.c.b16 %v914, %v912
      %v1049 = vpack.c.b16 %v917, %v915
      %v1050 = vpack.c.b16 %v918, %v916
      %v1051 = vpack.c.b16 %v921, %v919
      %v1052 = vpack.c.b16 %v922, %v920
      %v1053 = vpack.c.b16 %v925, %v923
      %v1054 = vpack.c.b16 %v926, %v924
      %v1055 = vpack.c.b16 %v929, %v927
      %v1056 = vpack.c.b16 %v930, %v928
      %v1057 = vpack.c.b16 %v933, %v931
      %v1058 = vpack.c.b16 %v934, %v932
      %v1059 = vpack.c.b16 %v937, %v935
      %v1060 = vpack.c.b16 %v938, %v936
      %v1061 = vpack.c.b16 %v941, %v939
      %v1062 = vpack.c.b16 %v942, %v940
      %v1063 = vpack.c.b16 %v945, %v943
      %v1064 = vpack.c.b16 %v946, %v944
      %v1065 = vpack.c.b16 %v949, %v947
      %v1066 = vpack.c.b16 %v950, %v948
      %v1067 = vpack.c.b16 %v953, %v951
      %v1068 = vpack.c.b16 %v954, %v952
      %v1069 = vpack.c.b16 %v957, %v955
      %v1070 = vpack.c.b16 %v958, %v956
      %v1071 = vpack.c.b16 %v961, %v959
      %v1072 = vpack.c.b16 %v962, %v960
      %v1073 = vpack.c.b16 %v965, %v963
      %v1074 = vpack.c.b16 %v966, %v964
      %v1075 = vpack.c.b16 %v969, %v967
      %v1076 = vpack.c.b16 %v970, %v968
      %v1077 = vpack.c.b16 %v973, %v971
      %v1078 = vpack.c.b16 %v974, %v972
      %v1079 = vpack.c.b16 %v977, %v975
      %v1080 = vpack.c.b16 %v978, %v976
      %v1081 = vpack.c.b16 %v981, %v979
      %v1082 = vpack.c.b16 %v982, %v980
      %v1083 = vpack.c.b16 %v985, %v983
      %v1084 = vpack.c.b16 %v986, %v984
      %vm1183 = vcmask 130048
      %v1185 = vsel %vm1183, %v545, 0
      %v1188 = vsel %vm1183, %v552, 0
      %v1191 = vsel %vm1183, %v559, 0
      %v1194 = vsel %vm1183, %v566, 0
      %v1197 = vsel %vm1183, %v573, 0
      %v1200 = vsel %vm1183, %v580, 0
      %v1203 = vsel %vm1183, %v587, 0
      %v1206 = vsel %vm1183, %v594, 0
      %1208 = vmatprep.subr.bf16.mxu0 %v988
      %1209 = vmatpush1.bf16.msra.mxu0 %v987
      %1210 = vmatprep.subr.bf16.mxu0 %v990
      %1211 = vmatpush1.bf16.msra.mxu0 %v989
      %1212 = vmatprep.subr.bf16.mxu0 %v992
      %1213 = vmatpush1.bf16.msra.mxu0 %v991
      %1214 = vmatprep.subr.bf16.mxu0 %v994
      %1215 = vmatpush1.bf16.msra.mxu0 %v993
      %1216 = vmatprep.subr.bf16.mxu0 %v996
      %1217 = vmatpush1.bf16.msra.mxu0 %v995
      %1218 = vmatprep.subr.bf16.mxu0 %v998
      %1219 = vmatpush1.bf16.msra.mxu0 %v997
      %1220 = vmatprep.subr.bf16.mxu0 %v1000
      %1221 = vmatpush1.bf16.msra.mxu0 %v999
      %1222 = vmatprep.subr.bf16.mxu0 %v1002
      %1223 = vmatpush1.bf16.msra.mxu0 %v1001
      %1224 = vmatprep.subr.bf16.mxu0 %v1004
      %1225 = vmatpush1.bf16.msra.mxu0 %v1003
      %1226 = vmatprep.subr.bf16.mxu0 %v1006
      %1227 = vmatpush1.bf16.msra.mxu0 %v1005
      %1228 = vmatprep.subr.bf16.mxu0 %v1008
      %1229 = vmatpush1.bf16.msra.mxu0 %v1007
      %1230 = vmatprep.subr.bf16.mxu0 %v1010
      %1231 = vmatpush1.bf16.msra.mxu0 %v1009
      %1232 = vmatprep.subr.bf16.mxu0 %v1012
      %1233 = vmatpush1.bf16.msra.mxu0 %v1011
      %1234 = vmatprep.subr.bf16.mxu0 %v1014
      %1235 = vmatpush1.bf16.msra.mxu0 %v1013
      %1236 = vmatprep.subr.bf16.mxu0 %v1016
      %1237 = vmatpush1.bf16.msra.mxu0 %v1015
      %1238 = vmatprep.subr.bf16.mxu0 %v1018
      %1239 = vmatpush1.bf16.msra.mxu0 %v1017
      %1240 = vmatprep.mubr.bf16.mxu0 %v540
      %1241 = vmatmul.mubr.bf16.gmra.mrb[0].mxu0 %v539
      %v1242 = vpop.f32.mrb[0].mxu0
      %v1243 = vadd.f32 0.0, %v1242
      %v1244 = vpop.f32.mrb[0].mxu0
      %v1245 = vadd.f32 0.0, %v1244
      %v1246 = vpop.f32.mrb[0].mxu0
      %v1247 = vadd.f32 0.0, %v1246
      %v1248 = vpop.f32.mrb[0].mxu0
      %v1249 = vadd.f32 0.0, %v1248
      %1250 = vmatprep.mubr.bf16.mxu0 %v547
      %1251 = vmatmul.mubr.bf16.gmra.mrb[0].mxu0 %v546
      %v1252 = vpop.f32.mrb[0].mxu0
      %v1253 = vadd.f32 0.0, %v1252
      %v1254 = vpop.f32.mrb[0].mxu0
      %v1255 = vadd.f32 0.0, %v1254
      %v1256 = vpop.f32.mrb[0].mxu0
      %v1257 = vadd.f32 0.0, %v1256
      %v1258 = vpop.f32.mrb[0].mxu0
      %v1259 = vadd.f32 0.0, %v1258
      %1260 = vmatprep.mubr.bf16.mxu0 %v554
      %1261 = vmatmul.mubr.bf16.gmra.mrb[0].mxu0 %v553
      %v1262 = vpop.f32.mrb[0].mxu0
      %v1263 = vadd.f32 0.0, %v1262
      %v1264 = vpop.f32.mrb[0].mxu0
      %v1265 = vadd.f32 0.0, %v1264
      %v1266 = vpop.f32.mrb[0].mxu0
      %v1267 = vadd.f32 0.0, %v1266
      %v1268 = vpop.f32.mrb[0].mxu0
      %v1269 = vadd.f32 0.0, %v1268
      %1270 = vmatprep.mubr.bf16.mxu0 %v561
      %1271 = vmatmul.mubr.bf16.gmra.mrb[0].mxu0 %v560
      %v1272 = vpop.f32.mrb[0].mxu0
      %v1273 = vadd.f32 0.0, %v1272
      %v1274 = vpop.f32.mrb[0].mxu0
      %v1275 = vadd.f32 0.0, %v1274
      %v1276 = vpop.f32.mrb[0].mxu0
      %v1277 = vadd.f32 0.0, %v1276
      %v1278 = vpop.f32.mrb[0].mxu0
      %v1279 = vadd.f32 0.0, %v1278
      %1280 = vmatprep.mubr.bf16.mxu0 %v568
      %1281 = vmatmul.mubr.bf16.gmra.mrb[0].mxu0 %v567
      %v1282 = vpop.f32.mrb[0].mxu0
      %v1283 = vadd.f32 0.0, %v1282
      %v1284 = vpop.f32.mrb[0].mxu0
      %v1285 = vadd.f32 0.0, %v1284
      %v1286 = vpop.f32.mrb[0].mxu0
      %v1287 = vadd.f32 0.0, %v1286
      %v1288 = vpop.f32.mrb[0].mxu0
      %v1289 = vadd.f32 0.0, %v1288
      %1290 = vmatprep.mubr.bf16.mxu0 %v575
      %1291 = vmatmul.mubr.bf16.gmra.mrb[0].mxu0 %v574
      %v1292 = vpop.f32.mrb[0].mxu0
      %v1293 = vadd.f32 0.0, %v1292
      %v1294 = vpop.f32.mrb[0].mxu0
      %v1295 = vadd.f32 0.0, %v1294
      %v1296 = vpop.f32.mrb[0].mxu0
      %v1297 = vadd.f32 0.0, %v1296
      %v1298 = vpop.f32.mrb[0].mxu0
      %v1299 = vadd.f32 0.0, %v1298
      %1300 = vmatprep.mubr.bf16.mxu0 %v582
      %1301 = vmatmul.mubr.bf16.gmra.mrb[0].mxu0 %v581
      %v1302 = vpop.f32.mrb[0].mxu0
      %v1303 = vadd.f32 0.0, %v1302
      %v1304 = vpop.f32.mrb[0].mxu0
      %v1305 = vadd.f32 0.0, %v1304
      %v1306 = vpop.f32.mrb[0].mxu0
      %v1307 = vadd.f32 0.0, %v1306
      %v1308 = vpop.f32.mrb[0].mxu0
      %v1309 = vadd.f32 0.0, %v1308
      %1310 = vmatprep.mubr.bf16.mxu0 %v589
      %1311 = vmatmul.mubr.bf16.gmra.mrb[0].mxu0 %v588
      %v1312 = vpop.f32.mrb[0].mxu0
      %v1313 = vadd.f32 0.0, %v1312
      %v1314 = vpop.f32.mrb[0].mxu0
      %v1315 = vadd.f32 0.0, %v1314
      %v1316 = vpop.f32.mrb[0].mxu0
      %v1317 = vadd.f32 0.0, %v1316
      %v1318 = vpop.f32.mrb[0].mxu0
      %v1319 = vadd.f32 0.0, %v1318
      %1320 = vdwg.mxu0
      %1321 = vmatprep.subr.bf16.mxu0 %v1020
      %1322 = vmatpush1.bf16.msra.mxu0 %v1019
      %1323 = vmatprep.subr.bf16.mxu0 %v1022
      %1324 = vmatpush1.bf16.msra.mxu0 %v1021
      %1325 = vmatprep.subr.bf16.mxu0 %v1024
      %1326 = vmatpush1.bf16.msra.mxu0 %v1023
      %1327 = vmatprep.subr.bf16.mxu0 %v1026
      %1328 = vmatpush1.bf16.msra.mxu0 %v1025
      %1329 = vmatprep.subr.bf16.mxu0 %v1028
      %1330 = vmatpush1.bf16.msra.mxu0 %v1027
      %1331 = vmatprep.subr.bf16.mxu0 %v1030
      %1332 = vmatpush1.bf16.msra.mxu0 %v1029
      %1333 = vmatprep.subr.bf16.mxu0 %v1032
      %1334 = vmatpush1.bf16.msra.mxu0 %v1031
      %1335 = vmatprep.subr.bf16.mxu0 %v1034
      %1336 = vmatpush1.bf16.msra.mxu0 %v1033
      %1337 = vmatprep.subr.bf16.mxu0 %v1036
      %1338 = vmatpush1.bf16.msra.mxu0 %v1035
      %1339 = vmatprep.subr.bf16.mxu0 %v1038
      %1340 = vmatpush1.bf16.msra.mxu0 %v1037
      %1341 = vmatprep.subr.bf16.mxu0 %v1040
      %1342 = vmatpush1.bf16.msra.mxu0 %v1039
      %1343 = vmatprep.subr.bf16.mxu0 %v1042
      %1344 = vmatpush1.bf16.msra.mxu0 %v1041
      %1345 = vmatprep.subr.bf16.mxu0 %v1044
      %1346 = vmatpush1.bf16.msra.mxu0 %v1043
      %1347 = vmatprep.subr.bf16.mxu0 %v1046
      %1348 = vmatpush1.bf16.msra.mxu0 %v1045
      %1349 = vmatprep.subr.bf16.mxu0 %v1048
      %1350 = vmatpush1.bf16.msra.mxu0 %v1047
      %1351 = vmatprep.subr.bf16.mxu0 %v1050
      %1352 = vmatpush1.bf16.msra.mxu0 %v1049
      %1353 = vmatprep.mubr.bf16.mxu0 %v542
      %1354 = vmatmul.mubr.bf16.gmra.mrb[0].mxu0 %v541
      %v1355 = vpop.f32.mrb[0].mxu0
      %v1356 = vadd.f32 %v1243, %v1355
      %v1357 = vpop.f32.mrb[0].mxu0
      %v1358 = vadd.f32 %v1245, %v1357
      %v1359 = vpop.f32.mrb[0].mxu0
      %v1360 = vadd.f32 %v1247, %v1359
      %v1361 = vpop.f32.mrb[0].mxu0
      %v1362 = vadd.f32 %v1249, %v1361
      %1363 = vmatprep.mubr.bf16.mxu0 %v549
      %1364 = vmatmul.mubr.bf16.gmra.mrb[0].mxu0 %v548
      %v1365 = vpop.f32.mrb[0].mxu0
      %v1366 = vadd.f32 %v1253, %v1365
      %v1367 = vpop.f32.mrb[0].mxu0
      %v1368 = vadd.f32 %v1255, %v1367
      %v1369 = vpop.f32.mrb[0].mxu0
      %v1370 = vadd.f32 %v1257, %v1369
      %v1371 = vpop.f32.mrb[0].mxu0
      %v1372 = vadd.f32 %v1259, %v1371
      %1373 = vmatprep.mubr.bf16.mxu0 %v556
      %1374 = vmatmul.mubr.bf16.gmra.mrb[0].mxu0 %v555
      %v1375 = vpop.f32.mrb[0].mxu0
      %v1376 = vadd.f32 %v1263, %v1375
      %v1377 = vpop.f32.mrb[0].mxu0
      %v1378 = vadd.f32 %v1265, %v1377
      %v1379 = vpop.f32.mrb[0].mxu0
      %v1380 = vadd.f32 %v1267, %v1379
      %v1381 = vpop.f32.mrb[0].mxu0
      %v1382 = vadd.f32 %v1269, %v1381
      %1383 = vmatprep.mubr.bf16.mxu0 %v563
      %1384 = vmatmul.mubr.bf16.gmra.mrb[0].mxu0 %v562
      %v1385 = vpop.f32.mrb[0].mxu0
      %v1386 = vadd.f32 %v1273, %v1385
      %v1387 = vpop.f32.mrb[0].mxu0
      %v1388 = vadd.f32 %v1275, %v1387
      %v1389 = vpop.f32.mrb[0].mxu0
      %v1390 = vadd.f32 %v1277, %v1389
      %v1391 = vpop.f32.mrb[0].mxu0
      %v1392 = vadd.f32 %v1279, %v1391
      %1393 = vmatprep.mubr.bf16.mxu0 %v570
      %1394 = vmatmul.mubr.bf16.gmra.mrb[0].mxu0 %v569
      %v1395 = vpop.f32.mrb[0].mxu0
      %v1396 = vadd.f32 %v1283, %v1395
      %v1397 = vpop.f32.mrb[0].mxu0
      %v1398 = vadd.f32 %v1285, %v1397
      %v1399 = vpop.f32.mrb[0].mxu0
      %v1400 = vadd.f32 %v1287, %v1399
      %v1401 = vpop.f32.mrb[0].mxu0
      %v1402 = vadd.f32 %v1289, %v1401
      %1403 = vmatprep.mubr.bf16.mxu0 %v577
      %1404 = vmatmul.mubr.bf16.gmra.mrb[0].mxu0 %v576
      %v1405 = vpop.f32.mrb[0].mxu0
      %v1406 = vadd.f32 %v1293, %v1405
      %v1407 = vpop.f32.mrb[0].mxu0
      %v1408 = vadd.f32 %v1295, %v1407
      %v1409 = vpop.f32.mrb[0].mxu0
      %v1410 = vadd.f32 %v1297, %v1409
      %v1411 = vpop.f32.mrb[0].mxu0
      %v1412 = vadd.f32 %v1299, %v1411
      %1413 = vmatprep.mubr.bf16.mxu0 %v584
      %1414 = vmatmul.mubr.bf16.gmra.mrb[0].mxu0 %v583
      %v1415 = vpop.f32.mrb[0].mxu0
      %v1416 = vadd.f32 %v1303, %v1415
      %v1417 = vpop.f32.mrb[0].mxu0
      %v1418 = vadd.f32 %v1305, %v1417
      %v1419 = vpop.f32.mrb[0].mxu0
      %v1420 = vadd.f32 %v1307, %v1419
      %v1421 = vpop.f32.mrb[0].mxu0
      %v1422 = vadd.f32 %v1309, %v1421
      %1423 = vmatprep.mubr.bf16.mxu0 %v591
      %1424 = vmatmul.mubr.bf16.gmra.mrb[0].mxu0 %v590
      %v1425 = vpop.f32.mrb[0].mxu0
      %v1426 = vadd.f32 %v1313, %v1425
      %v1427 = vpop.f32.mrb[0].mxu0
      %v1428 = vadd.f32 %v1315, %v1427
      %v1429 = vpop.f32.mrb[0].mxu0
      %v1430 = vadd.f32 %v1317, %v1429
      %v1431 = vpop.f32.mrb[0].mxu0
      %v1432 = vadd.f32 %v1319, %v1431
      %1433 = vdwg.mxu0
      %1434 = vmatprep.subr.bf16.mxu0 %v1052
      %1435 = vmatpush1.bf16.msra.mxu0 %v1051
      %1436 = vmatprep.subr.bf16.mxu0 %v1054
      %1437 = vmatpush1.bf16.msra.mxu0 %v1053
      %1438 = vmatprep.subr.bf16.mxu0 %v1056
      %1439 = vmatpush1.bf16.msra.mxu0 %v1055
      %1440 = vmatprep.subr.bf16.mxu0 %v1058
      %1441 = vmatpush1.bf16.msra.mxu0 %v1057
      %1442 = vmatprep.subr.bf16.mxu0 %v1060
      %1443 = vmatpush1.bf16.msra.mxu0 %v1059
      %1444 = vmatprep.subr.bf16.mxu0 %v1062
      %1445 = vmatpush1.bf16.msra.mxu0 %v1061
      %1446 = vmatprep.subr.bf16.mxu0 %v1064
      %1447 = vmatpush1.bf16.msra.mxu0 %v1063
      %1448 = vmatprep.subr.bf16.mxu0 %v1066
      %1449 = vmatpush1.bf16.msra.mxu0 %v1065
      %1450 = vmatprep.subr.bf16.mxu0 %v1068
      %1451 = vmatpush1.bf16.msra.mxu0 %v1067
      %1452 = vmatprep.subr.bf16.mxu0 %v1070
      %1453 = vmatpush1.bf16.msra.mxu0 %v1069
      %1454 = vmatprep.subr.bf16.mxu0 %v1072
      %1455 = vmatpush1.bf16.msra.mxu0 %v1071
      %1456 = vmatprep.subr.bf16.mxu0 %v1074
      %1457 = vmatpush1.bf16.msra.mxu0 %v1073
      %1458 = vmatprep.subr.bf16.mxu0 %v1076
      %1459 = vmatpush1.bf16.msra.mxu0 %v1075
      %1460 = vmatprep.subr.bf16.mxu0 %v1078
      %1461 = vmatpush1.bf16.msra.mxu0 %v1077
      %1462 = vmatprep.subr.bf16.mxu0 %v1080
      %1463 = vmatpush1.bf16.msra.mxu0 %v1079
      %1464 = vmatprep.subr.bf16.mxu0 %v1082
      %1465 = vmatpush1.bf16.msra.mxu0 %v1081
      %1466 = vmatprep.mubr.bf16.mxu0 %v544
      %1467 = vmatmul.mubr.bf16.gmra.mrb[0].mxu0 %v543
      %v1468 = vpop.f32.mrb[0].mxu0
      %v1469 = vadd.f32 %v1356, %v1468
      %v1470 = vpop.f32.mrb[0].mxu0
      %v1471 = vadd.f32 %v1358, %v1470
      %v1472 = vpop.f32.mrb[0].mxu0
      %v1473 = vadd.f32 %v1360, %v1472
      %v1474 = vpop.f32.mrb[0].mxu0
      %v1475 = vadd.f32 %v1362, %v1474
      %1476 = vmatprep.mubr.bf16.mxu0 %v551
      %1477 = vmatmul.mubr.bf16.gmra.mrb[0].mxu0 %v550
      %v1478 = vpop.f32.mrb[0].mxu0
      %v1479 = vadd.f32 %v1366, %v1478
      %v1480 = vpop.f32.mrb[0].mxu0
      %v1481 = vadd.f32 %v1368, %v1480
      %v1482 = vpop.f32.mrb[0].mxu0
      %v1483 = vadd.f32 %v1370, %v1482
      %v1484 = vpop.f32.mrb[0].mxu0
      %v1485 = vadd.f32 %v1372, %v1484
      %1486 = vmatprep.mubr.bf16.mxu0 %v558
      %1487 = vmatmul.mubr.bf16.gmra.mrb[0].mxu0 %v557
      %v1488 = vpop.f32.mrb[0].mxu0
      %v1489 = vadd.f32 %v1376, %v1488
      %v1490 = vpop.f32.mrb[0].mxu0
      %v1491 = vadd.f32 %v1378, %v1490
      %v1492 = vpop.f32.mrb[0].mxu0
      %v1493 = vadd.f32 %v1380, %v1492
      %v1494 = vpop.f32.mrb[0].mxu0
      %v1495 = vadd.f32 %v1382, %v1494
      %1496 = vmatprep.mubr.bf16.mxu0 %v565
      %1497 = vmatmul.mubr.bf16.gmra.mrb[0].mxu0 %v564
      %v1498 = vpop.f32.mrb[0].mxu0
      %v1499 = vadd.f32 %v1386, %v1498
      %v1500 = vpop.f32.mrb[0].mxu0
      %v1501 = vadd.f32 %v1388, %v1500
      %v1502 = vpop.f32.mrb[0].mxu0
      %v1503 = vadd.f32 %v1390, %v1502
      %v1504 = vpop.f32.mrb[0].mxu0
      %v1505 = vadd.f32 %v1392, %v1504
      %1506 = vmatprep.mubr.bf16.mxu0 %v572
      %1507 = vmatmul.mubr.bf16.gmra.mrb[0].mxu0 %v571
      %v1508 = vpop.f32.mrb[0].mxu0
      %v1509 = vadd.f32 %v1396, %v1508
      %v1510 = vpop.f32.mrb[0].mxu0
      %v1511 = vadd.f32 %v1398, %v1510
      %v1512 = vpop.f32.mrb[0].mxu0
      %v1513 = vadd.f32 %v1400, %v1512
      %v1514 = vpop.f32.mrb[0].mxu0
      %v1515 = vadd.f32 %v1402, %v1514
      %1516 = vmatprep.mubr.bf16.mxu0 %v579
      %1517 = vmatmul.mubr.bf16.gmra.mrb[0].mxu0 %v578
      %v1518 = vpop.f32.mrb[0].mxu0
      %v1519 = vadd.f32 %v1406, %v1518
      %v1520 = vpop.f32.mrb[0].mxu0
      %v1521 = vadd.f32 %v1408, %v1520
      %v1522 = vpop.f32.mrb[0].mxu0
      %v1523 = vadd.f32 %v1410, %v1522
      %v1524 = vpop.f32.mrb[0].mxu0
      %v1525 = vadd.f32 %v1412, %v1524
      %1526 = vmatprep.mubr.bf16.mxu0 %v586
      %1527 = vmatmul.mubr.bf16.gmra.mrb[0].mxu0 %v585
      %v1528 = vpop.f32.mrb[0].mxu0
      %v1529 = vadd.f32 %v1416, %v1528
      %v1530 = vpop.f32.mrb[0].mxu0
      %v1531 = vadd.f32 %v1418, %v1530
      %v1532 = vpop.f32.mrb[0].mxu0
      %v1533 = vadd.f32 %v1420, %v1532
      %v1534 = vpop.f32.mrb[0].mxu0
      %v1535 = vadd.f32 %v1422, %v1534
      %1536 = vmatprep.mubr.bf16.mxu0 %v593
      %1537 = vmatmul.mubr.bf16.gmra.mrb[0].mxu0 %v592
      %v1538 = vpop.f32.mrb[0].mxu0
      %v1539 = vadd.f32 %v1426, %v1538
      %v1540 = vpop.f32.mrb[0].mxu0
      %v1541 = vadd.f32 %v1428, %v1540
      %v1542 = vpop.f32.mrb[0].mxu0
      %v1543 = vadd.f32 %v1430, %v1542
      %v1544 = vpop.f32.mrb[0].mxu0
      %v1545 = vadd.f32 %v1432, %v1544
      %1546 = vdwg.mxu0
      %1547 = vmatprep.subr.bf16.mxu0 %v1084
      %1548 = vmatpush1.bf16.msra.mxu0 %v1083
      %1549 = vmatprep.subr.bf16.mxu0 0
      %1550 = vmatpush1.bf16.msra.mxu0 0
      %1551 = vmatprep.subr.bf16.mxu0 0
      %1552 = vmatpush1.bf16.msra.mxu0 0
      %1553 = vmatprep.subr.bf16.mxu0 0
      %1554 = vmatpush1.bf16.msra.mxu0 0
      %1555 = vmatprep.subr.bf16.mxu0 0
      %1556 = vmatpush1.bf16.msra.mxu0 0
      %1557 = vmatprep.subr.bf16.mxu0 0
      %1558 = vmatpush1.bf16.msra.mxu0 0
      %1559 = vmatprep.subr.bf16.mxu0 0
      %1560 = vmatpush1.bf16.msra.mxu0 0
      %1561 = vmatprep.subr.bf16.mxu0 0
      %1562 = vmatpush1.bf16.msra.mxu0 0
      %1563 = vmatprep.subr.bf16.mxu0 0
      %1564 = vmatpush1.bf16.msra.mxu0 0
      %1565 = vmatprep.subr.bf16.mxu0 0
      %1566 = vmatpush1.bf16.msra.mxu0 0
      %1567 = vmatprep.subr.bf16.mxu0 0
      %1568 = vmatpush1.bf16.msra.mxu0 0
      %1569 = vmatprep.subr.bf16.mxu0 0
      %1570 = vmatpush1.bf16.msra.mxu0 0
      %1571 = vmatprep.subr.bf16.mxu0 0
      %1572 = vmatpush1.bf16.msra.mxu0 0
      %1573 = vmatprep.subr.bf16.mxu0 0
      %1574 = vmatpush1.bf16.msra.mxu0 0
      %1575 = vmatprep.subr.bf16.mxu0 0
      %1576 = vmatpush1.bf16.msra.mxu0 0
      %1577 = vmatprep.subr.bf16.mxu0 0
      %1578 = vmatpush1.bf16.msra.mxu0 0
      %1579 = vmatprep.mubr.bf16.mxu0 0
      %1580 = vmatmul.mubr.bf16.gmra.mrb[0].mxu0 %v1185
      %v1581 = vpop.f32.mrb[0].mxu0
      %v1582 = vadd.f32 %v1469, %v1581
      %v1583 = vpop.f32.mrb[0].mxu0
      %v1584 = vadd.f32 %v1471, %v1583
      %v1585 = vpop.f32.mrb[0].mxu0
      %v1586 = vadd.f32 %v1473, %v1585
      %v1587 = vpop.f32.mrb[0].mxu0
      %v1588 = vadd.f32 %v1475, %v1587
      %1589 = vmatprep.mubr.bf16.mxu0 0
      %1590 = vmatmul.mubr.bf16.gmra.mrb[0].mxu0 %v1188
      %v1591 = vpop.f32.mrb[0].mxu0
      %v1592 = vadd.f32 %v1479, %v1591
      %v1593 = vpop.f32.mrb[0].mxu0
      %v1594 = vadd.f32 %v1481, %v1593
      %v1595 = vpop.f32.mrb[0].mxu0
      %v1596 = vadd.f32 %v1483, %v1595
      %v1597 = vpop.f32.mrb[0].mxu0
      %v1598 = vadd.f32 %v1485, %v1597
      %1599 = vmatprep.mubr.bf16.mxu0 0
      %1600 = vmatmul.mubr.bf16.gmra.mrb[0].mxu0 %v1191
      %v1601 = vpop.f32.mrb[0].mxu0
      %v1602 = vadd.f32 %v1489, %v1601
      %v1603 = vpop.f32.mrb[0].mxu0
      %v1604 = vadd.f32 %v1491, %v1603
      %v1605 = vpop.f32.mrb[0].mxu0
      %v1606 = vadd.f32 %v1493, %v1605
      %v1607 = vpop.f32.mrb[0].mxu0
      %v1608 = vadd.f32 %v1495, %v1607
      %1609 = vmatprep.mubr.bf16.mxu0 0
      %1610 = vmatmul.mubr.bf16.gmra.mrb[0].mxu0 %v1194
      %v1611 = vpop.f32.mrb[0].mxu0
      %v1612 = vadd.f32 %v1499, %v1611
      %v1613 = vpop.f32.mrb[0].mxu0
      %v1614 = vadd.f32 %v1501, %v1613
      %v1615 = vpop.f32.mrb[0].mxu0
      %v1616 = vadd.f32 %v1503, %v1615
      %v1617 = vpop.f32.mrb[0].mxu0
      %v1618 = vadd.f32 %v1505, %v1617
      %1619 = vmatprep.mubr.bf16.mxu0 0
      %1620 = vmatmul.mubr.bf16.gmra.mrb[0].mxu0 %v1197
      %v1621 = vpop.f32.mrb[0].mxu0
      %v1622 = vadd.f32 %v1509, %v1621
      %v1623 = vpop.f32.mrb[0].mxu0
      %v1624 = vadd.f32 %v1511, %v1623
      %v1625 = vpop.f32.mrb[0].mxu0
      %v1626 = vadd.f32 %v1513, %v1625
      %v1627 = vpop.f32.mrb[0].mxu0
      %v1628 = vadd.f32 %v1515, %v1627
      %1629 = vmatprep.mubr.bf16.mxu0 0
      %1630 = vmatmul.mubr.bf16.gmra.mrb[0].mxu0 %v1200
      %v1631 = vpop.f32.mrb[0].mxu0
      %v1632 = vadd.f32 %v1519, %v1631
      %v1633 = vpop.f32.mrb[0].mxu0
      %v1634 = vadd.f32 %v1521, %v1633
      %v1635 = vpop.f32.mrb[0].mxu0
      %v1636 = vadd.f32 %v1523, %v1635
      %v1637 = vpop.f32.mrb[0].mxu0
      %v1638 = vadd.f32 %v1525, %v1637
      %1639 = vmatprep.mubr.bf16.mxu0 0
      %1640 = vmatmul.mubr.bf16.gmra.mrb[0].mxu0 %v1203
      %v1641 = vpop.f32.mrb[0].mxu0
      %v1642 = vadd.f32 %v1529, %v1641
      %v1643 = vpop.f32.mrb[0].mxu0
      %v1644 = vadd.f32 %v1531, %v1643
      %v1645 = vpop.f32.mrb[0].mxu0
      %v1646 = vadd.f32 %v1533, %v1645
      %v1647 = vpop.f32.mrb[0].mxu0
      %v1648 = vadd.f32 %v1535, %v1647
      %1649 = vmatprep.mubr.bf16.mxu0 0
      %1650 = vmatmul.mubr.bf16.gmra.mrb[0].mxu0 %v1206
      %v1651 = vpop.f32.mrb[0].mxu0
      %v1652 = vadd.f32 %v1539, %v1651
      %v1653 = vpop.f32.mrb[0].mxu0
      %v1654 = vadd.f32 %v1541, %v1653
      %v1655 = vpop.f32.mrb[0].mxu0
      %v1656 = vadd.f32 %v1543, %v1655
      %v1657 = vpop.f32.mrb[0].mxu0
      %v1658 = vadd.f32 %v1545, %v1657
      %1659 = vdwg.mxu0
      // Predicated region
      $region61: #{mnist_network_forward.1} parent=55 // pred_check
        %p1660 = pneg %p362
      $region62: #{mnist_network_forward.1} parent=55 // pred_check_branch
        %1662 = sbr.rel (%p1660) target = $region64
      $region63: #{mnist_network_forward.1} parent=55 // pred_region
        %v1663 = vsel %vm411, 1, 0
        %v1664 = vsel %vm412, 1, 0
        %v1665 = vsel %vm413, 1, 0
        %v1666 = vsel %vm414, 1, 0
        %v1667 = vsel %vm415, 1, 0
        %v1668 = vsel %vm416, 1, 0
        %v1669 = vsel %vm417, 1, 0
        %v1670 = vsel %vm418, 1, 0
        %v1671 = vsel %vm419, 1, 0
        %v1672 = vsel %vm420, 1, 0
        %v1673 = vsel %vm421, 1, 0
        %v1674 = vsel %vm422, 1, 0
        %v1675 = vsel %vm423, 1, 0
        %v1676 = vsel %vm424, 1, 0
        %v1677 = vsel %vm425, 1, 0
        %v1678 = vsel %vm426, 1, 0
        %vm1679 = vcmp.eq.s32.totalorder %v1663, 1
        %vm1680 = vcmp.eq.s32.totalorder %v1664, 1
        %vm1681 = vcmp.eq.s32.totalorder %v1665, 1
        %vm1682 = vcmp.eq.s32.totalorder %v1666, 1
        %vm1683 = vcmp.eq.s32.totalorder %v1667, 1
        %vm1684 = vcmp.eq.s32.totalorder %v1668, 1
        %vm1685 = vcmp.eq.s32.totalorder %v1669, 1
        %vm1686 = vcmp.eq.s32.totalorder %v1670, 1
        %vm1687 = vcmp.eq.s32.totalorder %v1671, 1
        %vm1688 = vcmp.eq.s32.totalorder %v1672, 1
        %vm1689 = vcmp.eq.s32.totalorder %v1673, 1
        %vm1690 = vcmp.eq.s32.totalorder %v1674, 1
        %vm1691 = vcmp.eq.s32.totalorder %v1675, 1
        %vm1692 = vcmp.eq.s32.totalorder %v1676, 1
        %vm1693 = vcmp.eq.s32.totalorder %v1677, 1
        %vm1694 = vcmp.eq.s32.totalorder %v1678, 1
        %v1695 = vsel %vm1679, %v1582, 0.0
        %v1696 = vsel %vm1679, %v1584, 0.0
        %v1697 = vsel %vm1680, %v1586, 0.0
        %v1698 = vsel %vm1680, %v1588, 0.0
        %v1699 = vsel %vm1681, %v1592, 0.0
        %v1700 = vsel %vm1681, %v1594, 0.0
        %v1701 = vsel %vm1682, %v1596, 0.0
        %v1702 = vsel %vm1682, %v1598, 0.0
        %v1703 = vsel %vm1683, %v1602, 0.0
        %v1704 = vsel %vm1683, %v1604, 0.0
        %v1705 = vsel %vm1684, %v1606, 0.0
        %v1706 = vsel %vm1684, %v1608, 0.0
        %v1707 = vsel %vm1685, %v1612, 0.0
        %v1708 = vsel %vm1685, %v1614, 0.0
        %v1709 = vsel %vm1686, %v1616, 0.0
        %v1710 = vsel %vm1686, %v1618, 0.0
        %v1711 = vsel %vm1687, %v1622, 0.0
        %v1712 = vsel %vm1687, %v1624, 0.0
        %v1713 = vsel %vm1688, %v1626, 0.0
        %v1714 = vsel %vm1688, %v1628, 0.0
        %v1715 = vsel %vm1689, %v1632, 0.0
        %v1716 = vsel %vm1689, %v1634, 0.0
        %v1717 = vsel %vm1690, %v1636, 0.0
        %v1718 = vsel %vm1690, %v1638, 0.0
        %v1719 = vsel %vm1691, %v1642, 0.0
        %v1720 = vsel %vm1691, %v1644, 0.0
        %v1721 = vsel %vm1692, %v1646, 0.0
        %v1722 = vsel %vm1692, %v1648, 0.0
        %v1723 = vsel %vm1693, %v1652, 0.0
        %v1724 = vsel %vm1693, %v1654, 0.0
        %v1725 = vsel %vm1694, %v1656, 0.0
        %v1726 = vsel %vm1694, %v1658, 0.0
        %v1727 = vld [vmem:[#allocation2] sm:$0x3]
        %v1728 = vadd.f32 %v1695, %v1697
        %v1729 = vadd.f32 %v1728, %v1699
        %v1730 = vadd.f32 %v1729, %v1701
        %v1731 = vadd.f32 %v1730, %v1703
        %v1732 = vadd.f32 %v1731, %v1705
        %v1733 = vadd.f32 %v1732, %v1707
        %v1734 = vadd.f32 %v1733, %v1709
        %v1735 = vadd.f32 %v1734, %v1711
        %v1736 = vadd.f32 %v1735, %v1713
        %v1737 = vadd.f32 %v1736, %v1715
        %v1738 = vadd.f32 %v1737, %v1717
        %v1739 = vadd.f32 %v1738, %v1719
        %v1740 = vadd.f32 %v1739, %v1721
        %v1741 = vadd.f32 %v1740, %v1723
        %v1742 = vadd.f32 %v1741, %v1725
        %v1743 = vrot.slane %v1742, 4
        %v1744 = vadd.f32 %v1742, %v1743
        %v1745 = vrot.slane %v1744, 2
        %v1746 = vadd.f32 %v1744, %v1745
        %v1747 = vrot.slane %v1746, 1
        %v1748 = vadd.f32 %v1746, %v1747
        %v1749 = vadd.f32 %v1696, %v1698
        %v1750 = vadd.f32 %v1749, %v1700
        %v1751 = vadd.f32 %v1750, %v1702
        %v1752 = vadd.f32 %v1751, %v1704
        %v1753 = vadd.f32 %v1752, %v1706
        %v1754 = vadd.f32 %v1753, %v1708
        %v1755 = vadd.f32 %v1754, %v1710
        %v1756 = vadd.f32 %v1755, %v1712
        %v1757 = vadd.f32 %v1756, %v1714
        %v1758 = vadd.f32 %v1757, %v1716
        %v1759 = vadd.f32 %v1758, %v1718
        %v1760 = vadd.f32 %v1759, %v1720
        %v1761 = vadd.f32 %v1760, %v1722
        %v1762 = vadd.f32 %v1761, %v1724
        %v1763 = vadd.f32 %v1762, %v1726
        %v1764 = vrot.slane %v1763, 4
        %v1765 = vadd.f32 %v1763, %v1764
        %v1766 = vrot.slane %v1765, 2
        %v1767 = vadd.f32 %v1765, %v1766
        %v1768 = vrot.slane %v1767, 1
        %v1769 = vadd.f32 %v1767, %v1768
        %v1772 = vcombine.low %v1748, %v1769
        %v1774 = vunpack.c.l.s4 1966171168
        %v1775 = vunpack.c.0.s8 %v1774
        %v1776 = vlaneseq
        %v1777 = vshrl.u32 %v1776, 7
        %v1778 = vsub.s32 %v1775, %v1777
        %v1779 = vrot.slane %v1772, %v1778
        %v1781 = vunpack.c.l.s4 1966171168
        %v1782 = vunpack.c.0.s8 %v1781
        %v1783 = vlaneseq
        %v1784 = vshrl.u32 %v1783, 7
        %v1785 = vsub.s32 %v1782, %v1784
        %v1786 = vrot.slane %v1779, %v1785
        %v1788 = vadd.f32 %v1727, %v1786
        %v1789 = vlaneseq
        %vm1790 = vcmp.ge.s32.totalorder %v1789, 0
        %vm1791 = vcmp.lt.s32.totalorder %v1789, 256
        %vm1792 = vmand %vm1790, %vm1791
        %1793 = vst.msk [vmem:[#allocation2] sm:$0x3] %vm1792, %v1788
        %v1794 = vld [vmem:[#allocation3] sm:$0x3]
        %v1795 = vmul.f32 %v1695, %v1695
        %v1796 = vmul.f32 %v1696, %v1696
        %v1797 = vmul.f32 %v1697, %v1697
        %v1798 = vmul.f32 %v1698, %v1698
        %v1799 = vmul.f32 %v1699, %v1699
        %v1800 = vmul.f32 %v1700, %v1700
        %v1801 = vmul.f32 %v1701, %v1701
        %v1802 = vmul.f32 %v1702, %v1702
        %v1803 = vmul.f32 %v1703, %v1703
        %v1804 = vmul.f32 %v1704, %v1704
        %v1805 = vmul.f32 %v1705, %v1705
        %v1806 = vmul.f32 %v1706, %v1706
        %v1807 = vmul.f32 %v1707, %v1707
        %v1808 = vmul.f32 %v1708, %v1708
        %v1809 = vmul.f32 %v1709, %v1709
        %v1810 = vmul.f32 %v1710, %v1710
        %v1811 = vmul.f32 %v1711, %v1711
        %v1812 = vmul.f32 %v1712, %v1712
        %v1813 = vmul.f32 %v1713, %v1713
        %v1814 = vmul.f32 %v1714, %v1714
        %v1815 = vmul.f32 %v1715, %v1715
        %v1816 = vmul.f32 %v1716, %v1716
        %v1817 = vmul.f32 %v1717, %v1717
        %v1818 = vmul.f32 %v1718, %v1718
        %v1819 = vmul.f32 %v1719, %v1719
        %v1820 = vmul.f32 %v1720, %v1720
        %v1821 = vmul.f32 %v1721, %v1721
        %v1822 = vmul.f32 %v1722, %v1722
        %v1823 = vmul.f32 %v1723, %v1723
        %v1824 = vmul.f32 %v1724, %v1724
        %v1825 = vmul.f32 %v1725, %v1725
        %v1826 = vmul.f32 %v1726, %v1726
        %v1827 = vadd.f32 %v1795, %v1797
        %v1828 = vadd.f32 %v1827, %v1799
        %v1829 = vadd.f32 %v1828, %v1801
        %v1830 = vadd.f32 %v1829, %v1803
        %v1831 = vadd.f32 %v1830, %v1805
        %v1832 = vadd.f32 %v1831, %v1807
        %v1833 = vadd.f32 %v1832, %v1809
        %v1834 = vadd.f32 %v1833, %v1811
        %v1835 = vadd.f32 %v1834, %v1813
        %v1836 = vadd.f32 %v1835, %v1815
        %v1837 = vadd.f32 %v1836, %v1817
        %v1838 = vadd.f32 %v1837, %v1819
        %v1839 = vadd.f32 %v1838, %v1821
        %v1840 = vadd.f32 %v1839, %v1823
        %v1841 = vadd.f32 %v1840, %v1825
        %v1842 = vrot.slane %v1841, 4
        %v1843 = vadd.f32 %v1841, %v1842
        %v1844 = vrot.slane %v1843, 2
        %v1845 = vadd.f32 %v1843, %v1844
        %v1846 = vrot.slane %v1845, 1
        %v1847 = vadd.f32 %v1845, %v1846
        %v1848 = vadd.f32 %v1796, %v1798
        %v1849 = vadd.f32 %v1848, %v1800
        %v1850 = vadd.f32 %v1849, %v1802
        %v1851 = vadd.f32 %v1850, %v1804
        %v1852 = vadd.f32 %v1851, %v1806
        %v1853 = vadd.f32 %v1852, %v1808
        %v1854 = vadd.f32 %v1853, %v1810
        %v1855 = vadd.f32 %v1854, %v1812
        %v1856 = vadd.f32 %v1855, %v1814
        %v1857 = vadd.f32 %v1856, %v1816
        %v1858 = vadd.f32 %v1857, %v1818
        %v1859 = vadd.f32 %v1858, %v1820
        %v1860 = vadd.f32 %v1859, %v1822
        %v1861 = vadd.f32 %v1860, %v1824
        %v1862 = vadd.f32 %v1861, %v1826
        %v1863 = vrot.slane %v1862, 4
        %v1864 = vadd.f32 %v1862, %v1863
        %v1865 = vrot.slane %v1864, 2
        %v1866 = vadd.f32 %v1864, %v1865
        %v1867 = vrot.slane %v1866, 1
        %v1868 = vadd.f32 %v1866, %v1867
        %v1871 = vcombine.low %v1847, %v1868
        %v1873 = vunpack.c.l.s4 1966171168
        %v1874 = vunpack.c.0.s8 %v1873
        %v1875 = vlaneseq
        %v1876 = vshrl.u32 %v1875, 7
        %v1877 = vsub.s32 %v1874, %v1876
        %v1878 = vrot.slane %v1871, %v1877
        %v1880 = vunpack.c.l.s4 1966171168
        %v1881 = vunpack.c.0.s8 %v1880
        %v1882 = vlaneseq
        %v1883 = vshrl.u32 %v1882, 7
        %v1884 = vsub.s32 %v1881, %v1883
        %v1885 = vrot.slane %v1878, %v1884
        %v1887 = vadd.f32 %v1794, %v1885
        %1888 = vst.msk [vmem:[#allocation3] sm:$0x3] %vm1792, %v1887
      $region64: #{mnist_network_forward.1} parent=55 // pred_fallthru
        _
      %p1889 = scmp.ge.s32.totalorder %s24, 1
      // Predicated region
      $region65: #{mnist_network_forward.1} parent=55 // pred_check
        %p1890 = pneg %p1889
      $region66: #{mnist_network_forward.1} parent=55 // pred_check_branch
        %1892 = sbr.rel (%p1890) target = $region68
      $region67: #{mnist_network_forward.1} parent=55 // pred_region
        %v1893 = vld [vmem:[#allocation2] sm:$0x3]
        %v1894 = vmul.f32 %v1893, 0.00390625
        %v1895 = vld [vmem:[#allocation3] sm:$0x3]
        %v1896 = vmul.f32 %v1895, 0.00390625
        %v1897 = vmul.f32 %v1894, %v1894
        %v1898 = vsub.f32 %v1896, %v1897
        %v1899 = vmax.f32 %v1898, 0.0
        %v1900 = vld [vmem:[%s2] sm:$0x3]
        %v1901 = vadd.f32 %v1899, 1e-05
        %v1902 = vrsqrt.pop %v1901
        %v1903 = vmul.f32 %v1900, %v1902
        %v1904 = vld [vmem:[%s3] sm:$0x3]
        %v1905 = vmul.f32 %v1894, %v1903
        %v1906 = vsub.f32 %v1904, %v1905
        %v1908 = vlaneseq
        %v1909 = vshrl.u32 %v1908, 7
        %v1910 = vsub.s32 0, %v1909
        %v1911 = vrot.slane %v1903, %v1910
        %v1912 = vlaneseq
        %v1913 = vshrl.u32 %v1912, 7
        %v1914 = vsub.s32 1, %v1913
        %v1915 = vrot.slane %v1903, %v1914
        %v1918 = vmul.f32 %v1582, %v1911
        %v1919 = vmul.f32 %v1584, %v1915
        %v1920 = vmul.f32 %v1586, %v1911
        %v1921 = vmul.f32 %v1588, %v1915
        %v1922 = vmul.f32 %v1592, %v1911
        %v1923 = vmul.f32 %v1594, %v1915
        %v1924 = vmul.f32 %v1596, %v1911
        %v1925 = vmul.f32 %v1598, %v1915
        %v1926 = vmul.f32 %v1602, %v1911
        %v1927 = vmul.f32 %v1604, %v1915
        %v1928 = vmul.f32 %v1606, %v1911
        %v1929 = vmul.f32 %v1608, %v1915
        %v1930 = vmul.f32 %v1612, %v1911
        %v1931 = vmul.f32 %v1614, %v1915
        %v1932 = vmul.f32 %v1616, %v1911
        %v1933 = vmul.f32 %v1618, %v1915
        %v1934 = vmul.f32 %v1622, %v1911
        %v1935 = vmul.f32 %v1624, %v1915
        %v1936 = vmul.f32 %v1626, %v1911
        %v1937 = vmul.f32 %v1628, %v1915
        %v1938 = vmul.f32 %v1632, %v1911
        %v1939 = vmul.f32 %v1634, %v1915
        %v1940 = vmul.f32 %v1636, %v1911
        %v1941 = vmul.f32 %v1638, %v1915
        %v1942 = vmul.f32 %v1642, %v1911
        %v1943 = vmul.f32 %v1644, %v1915
        %v1944 = vmul.f32 %v1646, %v1911
        %v1945 = vmul.f32 %v1648, %v1915
        %v1946 = vmul.f32 %v1652, %v1911
        %v1947 = vmul.f32 %v1654, %v1915
        %v1948 = vmul.f32 %v1656, %v1911
        %v1949 = vmul.f32 %v1658, %v1915
        %v1951 = vlaneseq
        %v1952 = vshrl.u32 %v1951, 7
        %v1953 = vsub.s32 0, %v1952
        %v1954 = vrot.slane %v1906, %v1953
        %v1955 = vlaneseq
        %v1956 = vshrl.u32 %v1955, 7
        %v1957 = vsub.s32 1, %v1956
        %v1958 = vrot.slane %v1906, %v1957
        %v1961 = vadd.f32 %v1918, %v1954
        %v1962 = vadd.f32 %v1919, %v1958
        %v1963 = vadd.f32 %v1920, %v1954
        %v1964 = vadd.f32 %v1921, %v1958
        %v1965 = vadd.f32 %v1922, %v1954
        %v1966 = vadd.f32 %v1923, %v1958
        %v1967 = vadd.f32 %v1924, %v1954
        %v1968 = vadd.f32 %v1925, %v1958
        %v1969 = vadd.f32 %v1926, %v1954
        %v1970 = vadd.f32 %v1927, %v1958
        %v1971 = vadd.f32 %v1928, %v1954
        %v1972 = vadd.f32 %v1929, %v1958
        %v1973 = vadd.f32 %v1930, %v1954
        %v1974 = vadd.f32 %v1931, %v1958
        %v1975 = vadd.f32 %v1932, %v1954
        %v1976 = vadd.f32 %v1933, %v1958
        %v1977 = vadd.f32 %v1934, %v1954
        %v1978 = vadd.f32 %v1935, %v1958
        %v1979 = vadd.f32 %v1936, %v1954
        %v1980 = vadd.f32 %v1937, %v1958
        %v1981 = vadd.f32 %v1938, %v1954
        %v1982 = vadd.f32 %v1939, %v1958
        %v1983 = vadd.f32 %v1940, %v1954
        %v1984 = vadd.f32 %v1941, %v1958
        %v1985 = vadd.f32 %v1942, %v1954
        %v1986 = vadd.f32 %v1943, %v1958
        %v1987 = vadd.f32 %v1944, %v1954
        %v1988 = vadd.f32 %v1945, %v1958
        %v1989 = vadd.f32 %v1946, %v1954
        %v1990 = vadd.f32 %v1947, %v1958
        %v1991 = vadd.f32 %v1948, %v1954
        %v1992 = vadd.f32 %v1949, %v1958
        %v1993 = vmax.f32 %v1961, 0.0
        %v1994 = vmax.f32 %v1962, 0.0
        %v1995 = vmax.f32 %v1963, 0.0
        %v1996 = vmax.f32 %v1964, 0.0
        %v1997 = vmax.f32 %v1965, 0.0
        %v1998 = vmax.f32 %v1966, 0.0
        %v1999 = vmax.f32 %v1967, 0.0
        %v2000 = vmax.f32 %v1968, 0.0
        %v2001 = vmax.f32 %v1969, 0.0
        %v2002 = vmax.f32 %v1970, 0.0
        %v2003 = vmax.f32 %v1971, 0.0
        %v2004 = vmax.f32 %v1972, 0.0
        %v2005 = vmax.f32 %v1973, 0.0
        %v2006 = vmax.f32 %v1974, 0.0
        %v2007 = vmax.f32 %v1975, 0.0
        %v2008 = vmax.f32 %v1976, 0.0
        %v2009 = vmax.f32 %v1977, 0.0
        %v2010 = vmax.f32 %v1978, 0.0
        %v2011 = vmax.f32 %v1979, 0.0
        %v2012 = vmax.f32 %v1980, 0.0
        %v2013 = vmax.f32 %v1981, 0.0
        %v2014 = vmax.f32 %v1982, 0.0
        %v2015 = vmax.f32 %v1983, 0.0
        %v2016 = vmax.f32 %v1984, 0.0
        %v2017 = vmax.f32 %v1985, 0.0
        %v2018 = vmax.f32 %v1986, 0.0
        %v2019 = vmax.f32 %v1987, 0.0
        %v2020 = vmax.f32 %v1988, 0.0
        %v2021 = vmax.f32 %v1989, 0.0
        %v2022 = vmax.f32 %v1990, 0.0
        %v2023 = vmax.f32 %v1991, 0.0
        %v2024 = vmax.f32 %v1992, 0.0
        %v2025 = vsel %vm411, 1, 0
        %v2026 = vsel %vm412, 1, 0
        %v2027 = vsel %vm413, 1, 0
        %v2028 = vsel %vm414, 1, 0
        %v2029 = vsel %vm415, 1, 0
        %v2030 = vsel %vm416, 1, 0
        %v2031 = vsel %vm417, 1, 0
        %v2032 = vsel %vm418, 1, 0
        %v2033 = vsel %vm419, 1, 0
        %v2034 = vsel %vm420, 1, 0
        %v2035 = vsel %vm421, 1, 0
        %v2036 = vsel %vm422, 1, 0
        %v2037 = vsel %vm423, 1, 0
        %v2038 = vsel %vm424, 1, 0
        %v2039 = vsel %vm425, 1, 0
        %v2040 = vsel %vm426, 1, 0
        %vm2041 = vcmp.eq.s32.totalorder %v2025, 1
        %vm2042 = vcmp.eq.s32.totalorder %v2026, 1
        %vm2043 = vcmp.eq.s32.totalorder %v2027, 1
        %vm2044 = vcmp.eq.s32.totalorder %v2028, 1
        %vm2045 = vcmp.eq.s32.totalorder %v2029, 1
        %vm2046 = vcmp.eq.s32.totalorder %v2030, 1
        %vm2047 = vcmp.eq.s32.totalorder %v2031, 1
        %vm2048 = vcmp.eq.s32.totalorder %v2032, 1
        %vm2049 = vcmp.eq.s32.totalorder %v2033, 1
        %vm2050 = vcmp.eq.s32.totalorder %v2034, 1
        %vm2051 = vcmp.eq.s32.totalorder %v2035, 1
        %vm2052 = vcmp.eq.s32.totalorder %v2036, 1
        %vm2053 = vcmp.eq.s32.totalorder %v2037, 1
        %vm2054 = vcmp.eq.s32.totalorder %v2038, 1
        %vm2055 = vcmp.eq.s32.totalorder %v2039, 1
        %vm2056 = vcmp.eq.s32.totalorder %v2040, 1
        %v2057 = vsel %vm2041, %v1993, 0.0
        %v2058 = vsel %vm2041, %v1994, 0.0
        %v2059 = vsel %vm2042, %v1995, 0.0
        %v2060 = vsel %vm2042, %v1996, 0.0
        %v2061 = vsel %vm2043, %v1997, 0.0
        %v2062 = vsel %vm2043, %v1998, 0.0
        %v2063 = vsel %vm2044, %v1999, 0.0
        %v2064 = vsel %vm2044, %v2000, 0.0
        %v2065 = vsel %vm2045, %v2001, 0.0
        %v2066 = vsel %vm2045, %v2002, 0.0
        %v2067 = vsel %vm2046, %v2003, 0.0
        %v2068 = vsel %vm2046, %v2004, 0.0
        %v2069 = vsel %vm2047, %v2005, 0.0
        %v2070 = vsel %vm2047, %v2006, 0.0
        %v2071 = vsel %vm2048, %v2007, 0.0
        %v2072 = vsel %vm2048, %v2008, 0.0
        %v2073 = vsel %vm2049, %v2009, 0.0
        %v2074 = vsel %vm2049, %v2010, 0.0
        %v2075 = vsel %vm2050, %v2011, 0.0
        %v2076 = vsel %vm2050, %v2012, 0.0
        %v2077 = vsel %vm2051, %v2013, 0.0
        %v2078 = vsel %vm2051, %v2014, 0.0
        %v2079 = vsel %vm2052, %v2015, 0.0
        %v2080 = vsel %vm2052, %v2016, 0.0
        %v2081 = vsel %vm2053, %v2017, 0.0
        %v2082 = vsel %vm2053, %v2018, 0.0
        %v2083 = vsel %vm2054, %v2019, 0.0
        %v2084 = vsel %vm2054, %v2020, 0.0
        %v2085 = vsel %vm2055, %v2021, 0.0
        %v2086 = vsel %vm2055, %v2022, 0.0
        %v2087 = vsel %vm2056, %v2023, 0.0
        %v2088 = vsel %vm2056, %v2024, 0.0
        %v2089 = vpack.c.bf16 %v2059, %v2057
        %v2090 = vpack.c.bf16 %v2060, %v2058
        %v2091 = vpack.c.bf16 %v2063, %v2061
        %v2092 = vpack.c.bf16 %v2064, %v2062
        %v2093 = vpack.c.bf16 %v2067, %v2065
        %v2094 = vpack.c.bf16 %v2068, %v2066
        %v2095 = vpack.c.bf16 %v2071, %v2069
        %v2096 = vpack.c.bf16 %v2072, %v2070
        %v2097 = vpack.c.bf16 %v2075, %v2073
        %v2098 = vpack.c.bf16 %v2076, %v2074
        %v2099 = vpack.c.bf16 %v2079, %v2077
        %v2100 = vpack.c.bf16 %v2080, %v2078
        %v2101 = vpack.c.bf16 %v2083, %v2081
        %v2102 = vpack.c.bf16 %v2084, %v2082
        %v2103 = vpack.c.bf16 %v2087, %v2085
        %v2104 = vpack.c.bf16 %v2088, %v2086
        %v2105 = vld [vmem:[%s4] sm:$0xf]
        %v2106 = vld [vmem:[%s4 + $0x4] sm:$0xf]
        %v2107 = vld [vmem:[%s4 + $0x8] sm:$0xf]
        %v2108 = vld [vmem:[%s4 + $0xc] sm:$0xf]
        %v2109 = vld [vmem:[%s4 + $0x10] sm:$0xf]
        %v2110 = vld [vmem:[%s4 + $0x14] sm:$0xf]
        %v2111 = vld [vmem:[%s4 + $0x18] sm:$0xf]
        %v2112 = vld [vmem:[%s4 + $0x1c] sm:$0xf]
        %v2113 = vld [vmem:[%s4 + $0x20] sm:$0xf]
        %v2114 = vld [vmem:[%s4 + $0x24] sm:$0xf]
        %v2115 = vld [vmem:[%s4 + $0x28] sm:$0xf]
        %v2116 = vld [vmem:[%s4 + $0x2c] sm:$0xf]
        %v2117 = vld [vmem:[%s4 + $0x30] sm:$0xf]
        %v2118 = vld [vmem:[%s4 + $0x34] sm:$0xf]
        %v2119 = vld [vmem:[%s4 + $0x38] sm:$0xf]
        %v2120 = vld [vmem:[%s4 + $0x3c] sm:$0xf]
        %v2121 = vld [vmem:[%s4 + $0x40] sm:$0xf]
        %v2122 = vld [vmem:[%s4 + $0x44] sm:$0xf]
        %v2123 = vld [vmem:[%s4 + $0x48] sm:$0xf]
        %v2124 = vld [vmem:[%s4 + $0x4c] sm:$0xf]
        %v2125 = vld [vmem:[%s4 + $0x50] sm:$0xf]
        %v2126 = vld [vmem:[%s4 + $0x54] sm:$0xf]
        %v2127 = vld [vmem:[%s4 + $0x58] sm:$0xf]
        %v2128 = vld [vmem:[%s4 + $0x5c] sm:$0xf]
        %v2129 = vld [vmem:[%s4 + $0x60] sm:$0xf]
        %v2130 = vld [vmem:[%s4 + $0x64] sm:$0xf]
        %v2131 = vld [vmem:[%s4 + $0x68] sm:$0xf]
        %v2132 = vld [vmem:[%s4 + $0x6c] sm:$0xf]
        %v2133 = vld [vmem:[%s4 + $0x70] sm:$0xf]
        %v2134 = vld [vmem:[%s4 + $0x74] sm:$0xf]
        %v2135 = vld [vmem:[%s4 + $0x78] sm:$0xf]
        %v2136 = vld [vmem:[%s4 + $0x7c] sm:$0xf]
        %v2169 = vunpack.c.l.b16 %v2105
        %v2170 = vunpack.c.l.b16 %v2106
        %v2171 = vunpack.c.l.b16 %v2107
        %v2172 = vunpack.c.l.b16 %v2108
        %v2173 = vunpack.c.l.b16 %v2109
        %v2174 = vunpack.c.l.b16 %v2110
        %v2175 = vunpack.c.l.b16 %v2111
        %v2176 = vunpack.c.l.b16 %v2112
        %v2177 = vunpack.c.l.b16 %v2113
        %v2178 = vunpack.c.l.b16 %v2114
        %v2179 = vunpack.c.l.b16 %v2115
        %v2180 = vunpack.c.l.b16 %v2116
        %v2181 = vunpack.c.l.b16 %v2117
        %v2182 = vunpack.c.l.b16 %v2118
        %v2183 = vunpack.c.l.b16 %v2119
        %v2184 = vunpack.c.l.b16 %v2120
        %v2185 = vunpack.c.l.b16 %v2121
        %v2186 = vunpack.c.l.b16 %v2122
        %v2187 = vunpack.c.l.b16 %v2123
        %v2188 = vunpack.c.l.b16 %v2124
        %v2189 = vunpack.c.l.b16 %v2125
        %v2190 = vunpack.c.l.b16 %v2126
        %v2191 = vunpack.c.l.b16 %v2127
        %v2192 = vunpack.c.l.b16 %v2128
        %v2193 = vunpack.c.l.b16 %v2129
        %v2194 = vunpack.c.l.b16 %v2130
        %v2195 = vunpack.c.l.b16 %v2131
        %v2196 = vunpack.c.l.b16 %v2132
        %v2197 = vunpack.c.l.b16 %v2133
        %v2198 = vunpack.c.l.b16 %v2134
        %v2199 = vunpack.c.l.b16 %v2135
        %v2200 = vunpack.c.l.b16 %v2136
        %v2201 = vpack.c.b16 %v2170, %v2169
        %v2202 = vpack.c.b16 %v2172, %v2171
        %v2203 = vpack.c.b16 %v2174, %v2173
        %v2204 = vpack.c.b16 %v2176, %v2175
        %v2205 = vpack.c.b16 %v2178, %v2177
        %v2206 = vpack.c.b16 %v2180, %v2179
        %v2207 = vpack.c.b16 %v2182, %v2181
        %v2208 = vpack.c.b16 %v2184, %v2183
        %v2209 = vpack.c.b16 %v2186, %v2185
        %v2210 = vpack.c.b16 %v2188, %v2187
        %v2211 = vpack.c.b16 %v2190, %v2189
        %v2212 = vpack.c.b16 %v2192, %v2191
        %v2213 = vpack.c.b16 %v2194, %v2193
        %v2214 = vpack.c.b16 %v2196, %v2195
        %v2215 = vpack.c.b16 %v2198, %v2197
        %v2216 = vpack.c.b16 %v2200, %v2199
        %2233 = vmatprep.subr.bf16.mxu0 0
        %2234 = vmatpush1.bf16.msra.mxu0 %v2201
        %2235 = vmatprep.subr.bf16.mxu0 0
        %2236 = vmatpush1.bf16.msra.mxu0 %v2202
        %2237 = vmatprep.subr.bf16.mxu0 0
        %2238 = vmatpush1.bf16.msra.mxu0 %v2203
        %2239 = vmatprep.subr.bf16.mxu0 0
        %2240 = vmatpush1.bf16.msra.mxu0 %v2204
        %2241 = vmatprep.subr.bf16.mxu0 0
        %2242 = vmatpush1.bf16.msra.mxu0 %v2205
        %2243 = vmatprep.subr.bf16.mxu0 0
        %2244 = vmatpush1.bf16.msra.mxu0 %v2206
        %2245 = vmatprep.subr.bf16.mxu0 0
        %2246 = vmatpush1.bf16.msra.mxu0 %v2207
        %2247 = vmatprep.subr.bf16.mxu0 0
        %2248 = vmatpush1.bf16.msra.mxu0 %v2208
        %2249 = vmatprep.subr.bf16.mxu0 0
        %2250 = vmatpush1.bf16.msra.mxu0 %v2209
        %2251 = vmatprep.subr.bf16.mxu0 0
        %2252 = vmatpush1.bf16.msra.mxu0 %v2210
        %2253 = vmatprep.subr.bf16.mxu0 0
        %2254 = vmatpush1.bf16.msra.mxu0 %v2211
        %2255 = vmatprep.subr.bf16.mxu0 0
        %2256 = vmatpush1.bf16.msra.mxu0 %v2212
        %2257 = vmatprep.subr.bf16.mxu0 0
        %2258 = vmatpush1.bf16.msra.mxu0 %v2213
        %2259 = vmatprep.subr.bf16.mxu0 0
        %2260 = vmatpush1.bf16.msra.mxu0 %v2214
        %2261 = vmatprep.subr.bf16.mxu0 0
        %2262 = vmatpush1.bf16.msra.mxu0 %v2215
        %2263 = vmatprep.subr.bf16.mxu0 0
        %2264 = vmatpush1.bf16.msra.mxu0 %v2216
        %2265 = vmatprep.mubr.bf16.mxu0 %v2090
        %2266 = vmatmul.mubr.bf16.gmra.mrb[0].mxu0 %v2089
        %v2267 = vpop.f32.mrb[0].mxu0
        %v2268 = vadd.f32 0.0, %v2267
        %v2269 = vpop.f32.mrb[0].mxu0
        %v2270 = vpop.f32.mrb[0].mxu0
        %v2271 = vadd.f32 0.0, %v2270
        %v2272 = vpop.f32.mrb[0].mxu0
        %2273 = vmatprep.mubr.bf16.mxu0 %v2092
        %2274 = vmatmul.mubr.bf16.gmra.mrb[0].mxu0 %v2091
        %v2275 = vpop.f32.mrb[0].mxu0
        %v2276 = vadd.f32 0.0, %v2275
        %v2277 = vpop.f32.mrb[0].mxu0
        %v2278 = vpop.f32.mrb[0].mxu0
        %v2279 = vadd.f32 0.0, %v2278
        %v2280 = vpop.f32.mrb[0].mxu0
        %2281 = vmatprep.mubr.bf16.mxu0 %v2094
        %2282 = vmatmul.mubr.bf16.gmra.mrb[0].mxu0 %v2093
        %v2283 = vpop.f32.mrb[0].mxu0
        %v2284 = vadd.f32 0.0, %v2283
        %v2285 = vpop.f32.mrb[0].mxu0
        %v2286 = vpop.f32.mrb[0].mxu0
        %v2287 = vadd.f32 0.0, %v2286
        %v2288 = vpop.f32.mrb[0].mxu0
        %2289 = vmatprep.mubr.bf16.mxu0 %v2096
        %2290 = vmatmul.mubr.bf16.gmra.mrb[0].mxu0 %v2095
        %v2291 = vpop.f32.mrb[0].mxu0
        %v2292 = vadd.f32 0.0, %v2291
        %v2293 = vpop.f32.mrb[0].mxu0
        %v2294 = vpop.f32.mrb[0].mxu0
        %v2295 = vadd.f32 0.0, %v2294
        %v2296 = vpop.f32.mrb[0].mxu0
        %2297 = vmatprep.mubr.bf16.mxu0 %v2098
        %2298 = vmatmul.mubr.bf16.gmra.mrb[0].mxu0 %v2097
        %v2299 = vpop.f32.mrb[0].mxu0
        %v2300 = vadd.f32 0.0, %v2299
        %v2301 = vpop.f32.mrb[0].mxu0
        %v2302 = vpop.f32.mrb[0].mxu0
        %v2303 = vadd.f32 0.0, %v2302
        %v2304 = vpop.f32.mrb[0].mxu0
        %2305 = vmatprep.mubr.bf16.mxu0 %v2100
        %2306 = vmatmul.mubr.bf16.gmra.mrb[0].mxu0 %v2099
        %v2307 = vpop.f32.mrb[0].mxu0
        %v2308 = vadd.f32 0.0, %v2307
        %v2309 = vpop.f32.mrb[0].mxu0
        %v2310 = vpop.f32.mrb[0].mxu0
        %v2311 = vadd.f32 0.0, %v2310
        %v2312 = vpop.f32.mrb[0].mxu0
        %2313 = vmatprep.mubr.bf16.mxu0 %v2102
        %2314 = vmatmul.mubr.bf16.gmra.mrb[0].mxu0 %v2101
        %v2315 = vpop.f32.mrb[0].mxu0
        %v2316 = vadd.f32 0.0, %v2315
        %v2317 = vpop.f32.mrb[0].mxu0
        %v2318 = vpop.f32.mrb[0].mxu0
        %v2319 = vadd.f32 0.0, %v2318
        %v2320 = vpop.f32.mrb[0].mxu0
        %2321 = vmatprep.mubr.bf16.mxu0 %v2104
        %2322 = vmatmul.mubr.bf16.gmra.mrb[0].mxu0 %v2103
        %v2323 = vpop.f32.mrb[0].mxu0
        %v2324 = vadd.f32 0.0, %v2323
        %v2325 = vpop.f32.mrb[0].mxu0
        %v2326 = vpop.f32.mrb[0].mxu0
        %v2327 = vadd.f32 0.0, %v2326
        %v2328 = vpop.f32.mrb[0].mxu0
        %2329 = vdwg.mxu0
        %p2330 = scmp.eq.s32.totalorder %s24, 1
        // Predicated region
        $region69: #{mnist_network_forward.1} parent=67 // pred_check
          %p2331 = pneg %p2330
        $region70: #{mnist_network_forward.1} parent=67 // pred_check_branch
          %2333 = sbr.rel (%p2331) target = $region72
        $region71: #{mnist_network_forward.1} parent=67 // pred_region
          %v2334 = vld [vmem:[#allocation4] sm:$0x1]
          %v2335 = vadd.f32 %v2268, %v2271
          %v2336 = vadd.f32 %v2335, %v2276
          %v2337 = vadd.f32 %v2336, %v2279
          %v2338 = vadd.f32 %v2337, %v2284
          %v2339 = vadd.f32 %v2338, %v2287
          %v2340 = vadd.f32 %v2339, %v2292
          %v2341 = vadd.f32 %v2340, %v2295
          %v2342 = vadd.f32 %v2341, %v2300
          %v2343 = vadd.f32 %v2342, %v2303
          %v2344 = vadd.f32 %v2343, %v2308
          %v2345 = vadd.f32 %v2344, %v2311
          %v2346 = vadd.f32 %v2345, %v2316
          %v2347 = vadd.f32 %v2346, %v2319
          %v2348 = vadd.f32 %v2347, %v2324
          %v2349 = vadd.f32 %v2348, %v2327
          %v2350 = vrot.slane %v2349, 4
          %v2351 = vadd.f32 %v2349, %v2350
          %v2352 = vrot.slane %v2351, 2
          %v2353 = vadd.f32 %v2351, %v2352
          %v2354 = vrot.slane %v2353, 1
          %v2355 = vadd.f32 %v2353, %v2354
          %v2356 = vadd.f32 %v2334, %v2355
          %2357 = vst [vmem:[#allocation4] sm:$0x1] %v2356
          %v2358 = vld [vmem:[#allocation5] sm:$0x1]
          %v2359 = vmul.f32 %v2268, %v2268
          %v2360 = vmul.f32 %v2271, %v2271
          %v2361 = vmul.f32 %v2276, %v2276
          %v2362 = vmul.f32 %v2279, %v2279
          %v2363 = vmul.f32 %v2284, %v2284
          %v2364 = vmul.f32 %v2287, %v2287
          %v2365 = vmul.f32 %v2292, %v2292
          %v2366 = vmul.f32 %v2295, %v2295
          %v2367 = vmul.f32 %v2300, %v2300
          %v2368 = vmul.f32 %v2303, %v2303
          %v2369 = vmul.f32 %v2308, %v2308
          %v2370 = vmul.f32 %v2311, %v2311
          %v2371 = vmul.f32 %v2316, %v2316
          %v2372 = vmul.f32 %v2319, %v2319
          %v2373 = vmul.f32 %v2324, %v2324
          %v2374 = vmul.f32 %v2327, %v2327
          %v2375 = vadd.f32 %v2359, %v2360
          %v2376 = vadd.f32 %v2375, %v2361
          %v2377 = vadd.f32 %v2376, %v2362
          %v2378 = vadd.f32 %v2377, %v2363
          %v2379 = vadd.f32 %v2378, %v2364
          %v2380 = vadd.f32 %v2379, %v2365
          %v2381 = vadd.f32 %v2380, %v2366
          %v2382 = vadd.f32 %v2381, %v2367
          %v2383 = vadd.f32 %v2382, %v2368
          %v2384 = vadd.f32 %v2383, %v2369
          %v2385 = vadd.f32 %v2384, %v2370
          %v2386 = vadd.f32 %v2385, %v2371
          %v2387 = vadd.f32 %v2386, %v2372
          %v2388 = vadd.f32 %v2387, %v2373
          %v2389 = vadd.f32 %v2388, %v2374
          %v2390 = vrot.slane %v2389, 4
          %v2391 = vadd.f32 %v2389, %v2390
          %v2392 = vrot.slane %v2391, 2
          %v2393 = vadd.f32 %v2391, %v2392
          %v2394 = vrot.slane %v2393, 1
          %v2395 = vadd.f32 %v2393, %v2394
          %v2396 = vadd.f32 %v2358, %v2395
          %2397 = vst [vmem:[#allocation5] sm:$0x1] %v2396
        $region72: #{mnist_network_forward.1} parent=67 // pred_fallthru
          _
        %p2398 = scmp.eq.s32.totalorder %s24, 2
        // Predicated region
        $region73: #{mnist_network_forward.1} parent=67 // pred_check
          %p2399 = pneg %p2398
        $region74: #{mnist_network_forward.1} parent=67 // pred_check_branch
          %2401 = sbr.rel (%p2399) target = $region76
        $region75: #{mnist_network_forward.1} parent=67 // pred_region
          %v2402 = vld [vmem:[#allocation4] sm:$0x1]
          %v2403 = vmul.f32 %v2402, 0.00390625
          %v2404 = vld [vmem:[#allocation5] sm:$0x1]
          %v2405 = vmul.f32 %v2404, 0.00390625
          %v2406 = vmul.f32 %v2403, %v2403
          %v2407 = vsub.f32 %v2405, %v2406
          %v2408 = vmax.f32 %v2407, 0.0
          %v2409 = vld [vmem:[%s5] sm:$0x1]
          %v2410 = vadd.f32 %v2408, 1e-05
          %v2411 = vrsqrt.pop %v2410
          %v2412 = vmul.f32 %v2409, %v2411
          %v2413 = vld [vmem:[%s6] sm:$0x1]
          %v2414 = vmul.f32 %v2403, %v2412
          %v2415 = vsub.f32 %v2413, %v2414
          %v2417 = vlaneseq
          %v2418 = vshrl.u32 %v2417, 7
          %v2419 = vsub.s32 0, %v2418
          %v2420 = vrot.slane %v2412, %v2419
          %v2422 = vmul.f32 %v2268, %v2420
          %v2423 = vmul.f32 %v2271, %v2420
          %v2424 = vmul.f32 %v2276, %v2420
          %v2425 = vmul.f32 %v2279, %v2420
          %v2426 = vmul.f32 %v2284, %v2420
          %v2427 = vmul.f32 %v2287, %v2420
          %v2428 = vmul.f32 %v2292, %v2420
          %v2429 = vmul.f32 %v2295, %v2420
          %v2430 = vmul.f32 %v2300, %v2420
          %v2431 = vmul.f32 %v2303, %v2420
          %v2432 = vmul.f32 %v2308, %v2420
          %v2433 = vmul.f32 %v2311, %v2420
          %v2434 = vmul.f32 %v2316, %v2420
          %v2435 = vmul.f32 %v2319, %v2420
          %v2436 = vmul.f32 %v2324, %v2420
          %v2437 = vmul.f32 %v2327, %v2420
          %v2439 = vlaneseq
          %v2440 = vshrl.u32 %v2439, 7
          %v2441 = vsub.s32 0, %v2440
          %v2442 = vrot.slane %v2415, %v2441
          %v2444 = vadd.f32 %v2422, %v2442
          %v2445 = vadd.f32 %v2423, %v2442
          %v2446 = vadd.f32 %v2424, %v2442
          %v2447 = vadd.f32 %v2425, %v2442
          %v2448 = vadd.f32 %v2426, %v2442
          %v2449 = vadd.f32 %v2427, %v2442
          %v2450 = vadd.f32 %v2428, %v2442
          %v2451 = vadd.f32 %v2429, %v2442
          %v2452 = vadd.f32 %v2430, %v2442
          %v2453 = vadd.f32 %v2431, %v2442
          %v2454 = vadd.f32 %v2432, %v2442
          %v2455 = vadd.f32 %v2433, %v2442
          %v2456 = vadd.f32 %v2434, %v2442
          %v2457 = vadd.f32 %v2435, %v2442
          %v2458 = vadd.f32 %v2436, %v2442
          %v2459 = vadd.f32 %v2437, %v2442
          %v2460 = vmax.f32 %v2444, 0.0
          %v2461 = vmax.f32 %v2445, 0.0
          %v2462 = vmax.f32 %v2446, 0.0
          %v2463 = vmax.f32 %v2447, 0.0
          %v2464 = vmax.f32 %v2448, 0.0
          %v2465 = vmax.f32 %v2449, 0.0
          %v2466 = vmax.f32 %v2450, 0.0
          %v2467 = vmax.f32 %v2451, 0.0
          %v2468 = vmax.f32 %v2452, 0.0
          %v2469 = vmax.f32 %v2453, 0.0
          %v2470 = vmax.f32 %v2454, 0.0
          %v2471 = vmax.f32 %v2455, 0.0
          %v2472 = vmax.f32 %v2456, 0.0
          %v2473 = vmax.f32 %v2457, 0.0
          %v2474 = vmax.f32 %v2458, 0.0
          %v2475 = vmax.f32 %v2459, 0.0
          %v2476 = vpack.c.bf16 %v2461, %v2460
          %v2477 = vpack.c.bf16 %v2463, %v2462
          %v2478 = vpack.c.bf16 %v2465, %v2464
          %v2479 = vpack.c.bf16 %v2467, %v2466
          %v2480 = vpack.c.bf16 %v2469, %v2468
          %v2481 = vpack.c.bf16 %v2471, %v2470
          %v2482 = vpack.c.bf16 %v2473, %v2472
          %v2483 = vpack.c.bf16 %v2475, %v2474
          %v2484 = vld [vmem:[%s7] sm:$0xf]
          %v2485 = vld [vmem:[%s7 + $0x4] sm:$0xf]
          %v2486 = vld [vmem:[%s7 + $0x8] sm:$0xf]
          %v2487 = vld [vmem:[%s7 + $0xc] sm:$0xf]
          %v2488 = vld [vmem:[%s7 + $0x10] sm:$0xf]
          %v2489 = vld [vmem:[%s7 + $0x14] sm:$0xf]
          %v2490 = vld [vmem:[%s7 + $0x18] sm:$0xf]
          %v2491 = vld [vmem:[%s7 + $0x1c] sm:$0xf]
          %v2492 = vld [vmem:[%s7 + $0x20] sm:$0xf]
          %v2493 = vld [vmem:[%s7 + $0x24] sm:$0xf]
          %v2494 = vld [vmem:[%s7 + $0x28] sm:$0xf]
          %v2495 = vld [vmem:[%s7 + $0x2c] sm:$0xf]
          %v2496 = vld [vmem:[%s7 + $0x30] sm:$0xf]
          %v2497 = vld [vmem:[%s7 + $0x34] sm:$0xf]
          %v2498 = vld [vmem:[%s7 + $0x38] sm:$0xf]
          %v2499 = vld [vmem:[%s7 + $0x3c] sm:$0xf]
          %v2500 = vld [vmem:[%s8] sm:$0x1]
          %v2502 = vlaneseq
          %v2503 = vshrl.u32 %v2502, 7
          %v2504 = vsub.s32 0, %v2503
          %v2505 = vrot.slane %v2500, %v2504
          %v2523 = vunpack.c.l.b16 %v2484
          %v2524 = vunpack.c.l.b16 %v2485
          %v2525 = vunpack.c.l.b16 %v2486
          %v2526 = vunpack.c.l.b16 %v2487
          %v2527 = vunpack.c.l.b16 %v2488
          %v2528 = vunpack.c.l.b16 %v2489
          %v2529 = vunpack.c.l.b16 %v2490
          %v2530 = vunpack.c.l.b16 %v2491
          %v2531 = vunpack.c.l.b16 %v2492
          %v2532 = vunpack.c.l.b16 %v2493
          %v2533 = vunpack.c.l.b16 %v2494
          %v2534 = vunpack.c.l.b16 %v2495
          %v2535 = vunpack.c.l.b16 %v2496
          %v2536 = vunpack.c.l.b16 %v2497
          %v2537 = vunpack.c.l.b16 %v2498
          %v2538 = vunpack.c.l.b16 %v2499
          %v2539 = vpack.c.b16 %v2524, %v2523
          %v2540 = vpack.c.b16 %v2526, %v2525
          %v2541 = vpack.c.b16 %v2528, %v2527
          %v2542 = vpack.c.b16 %v2530, %v2529
          %v2543 = vpack.c.b16 %v2532, %v2531
          %v2544 = vpack.c.b16 %v2534, %v2533
          %v2545 = vpack.c.b16 %v2536, %v2535
          %v2546 = vpack.c.b16 %v2538, %v2537
          %2555 = vmatprep.subr.bf16.mxu0 0
          %2556 = vmatpush1.bf16.msra.mxu0 %v2539
          %2557 = vmatprep.subr.bf16.mxu0 0
          %2558 = vmatpush1.bf16.msra.mxu0 %v2540
          %2559 = vmatprep.subr.bf16.mxu0 0
          %2560 = vmatpush1.bf16.msra.mxu0 %v2541
          %2561 = vmatprep.subr.bf16.mxu0 0
          %2562 = vmatpush1.bf16.msra.mxu0 %v2542
          %2563 = vmatprep.subr.bf16.mxu0 0
          %2564 = vmatpush1.bf16.msra.mxu0 %v2543
          %2565 = vmatprep.subr.bf16.mxu0 0
          %2566 = vmatpush1.bf16.msra.mxu0 %v2544
          %2567 = vmatprep.subr.bf16.mxu0 0
          %2568 = vmatpush1.bf16.msra.mxu0 %v2545
          %2569 = vmatprep.subr.bf16.mxu0 0
          %2570 = vmatpush1.bf16.msra.mxu0 %v2546
          %2571 = vmatprep.subr.bf16.mxu0 0
          %2572 = vmatpush1.bf16.msra.mxu0 0
          %2573 = vmatprep.subr.bf16.mxu0 0
          %2574 = vmatpush1.bf16.msra.mxu0 0
          %2575 = vmatprep.subr.bf16.mxu0 0
          %2576 = vmatpush1.bf16.msra.mxu0 0
          %2577 = vmatprep.subr.bf16.mxu0 0
          %2578 = vmatpush1.bf16.msra.mxu0 0
          %2579 = vmatprep.subr.bf16.mxu0 0
          %2580 = vmatpush1.bf16.msra.mxu0 0
          %2581 = vmatprep.subr.bf16.mxu0 0
          %2582 = vmatpush1.bf16.msra.mxu0 0
          %2583 = vmatprep.subr.bf16.mxu0 0
          %2584 = vmatpush1.bf16.msra.mxu0 0
          %2585 = vmatprep.subr.bf16.mxu0 0
          %2586 = vmatpush1.bf16.msra.mxu0 0
          %2587 = vmatprep.mubr.bf16.mxu0 0
          %2588 = vmatmul.mubr.bf16.gmra.mrb[0].mxu0 %v2476
          %v2589 = vpop.f32.mrb[0].mxu0
          %v2590 = vadd.f32 %v2505, %v2589
          %v2591 = vpop.f32.mrb[0].mxu0
          %v2592 = vpop.f32.mrb[0].mxu0
          %v2593 = vadd.f32 %v2505, %v2592
          %v2594 = vpop.f32.mrb[0].mxu0
          %2595 = vmatprep.mubr.bf16.mxu0 0
          %2596 = vmatmul.mubr.bf16.gmra.mrb[0].mxu0 %v2477
          %v2597 = vpop.f32.mrb[0].mxu0
          %v2598 = vadd.f32 %v2505, %v2597
          %v2599 = vpop.f32.mrb[0].mxu0
          %v2600 = vpop.f32.mrb[0].mxu0
          %v2601 = vadd.f32 %v2505, %v2600
          %v2602 = vpop.f32.mrb[0].mxu0
          %2603 = vmatprep.mubr.bf16.mxu0 0
          %2604 = vmatmul.mubr.bf16.gmra.mrb[0].mxu0 %v2478
          %v2605 = vpop.f32.mrb[0].mxu0
          %v2606 = vadd.f32 %v2505, %v2605
          %v2607 = vpop.f32.mrb[0].mxu0
          %v2608 = vpop.f32.mrb[0].mxu0
          %v2609 = vadd.f32 %v2505, %v2608
          %v2610 = vpop.f32.mrb[0].mxu0
          %2611 = vmatprep.mubr.bf16.mxu0 0
          %2612 = vmatmul.mubr.bf16.gmra.mrb[0].mxu0 %v2479
          %v2613 = vpop.f32.mrb[0].mxu0
          %v2614 = vadd.f32 %v2505, %v2613
          %v2615 = vpop.f32.mrb[0].mxu0
          %v2616 = vpop.f32.mrb[0].mxu0
          %v2617 = vadd.f32 %v2505, %v2616
          %v2618 = vpop.f32.mrb[0].mxu0
          %2619 = vmatprep.mubr.bf16.mxu0 0
          %2620 = vmatmul.mubr.bf16.gmra.mrb[0].mxu0 %v2480
          %v2621 = vpop.f32.mrb[0].mxu0
          %v2622 = vadd.f32 %v2505, %v2621
          %v2623 = vpop.f32.mrb[0].mxu0
          %v2624 = vpop.f32.mrb[0].mxu0
          %v2625 = vadd.f32 %v2505, %v2624
          %v2626 = vpop.f32.mrb[0].mxu0
          %2627 = vmatprep.mubr.bf16.mxu0 0
          %2628 = vmatmul.mubr.bf16.gmra.mrb[0].mxu0 %v2481
          %v2629 = vpop.f32.mrb[0].mxu0
          %v2630 = vadd.f32 %v2505, %v2629
          %v2631 = vpop.f32.mrb[0].mxu0
          %v2632 = vpop.f32.mrb[0].mxu0
          %v2633 = vadd.f32 %v2505, %v2632
          %v2634 = vpop.f32.mrb[0].mxu0
          %2635 = vmatprep.mubr.bf16.mxu0 0
          %2636 = vmatmul.mubr.bf16.gmra.mrb[0].mxu0 %v2482
          %v2637 = vpop.f32.mrb[0].mxu0
          %v2638 = vadd.f32 %v2505, %v2637
          %v2639 = vpop.f32.mrb[0].mxu0
          %v2640 = vpop.f32.mrb[0].mxu0
          %v2641 = vadd.f32 %v2505, %v2640
          %v2642 = vpop.f32.mrb[0].mxu0
          %2643 = vmatprep.mubr.bf16.mxu0 0
          %2644 = vmatmul.mubr.bf16.gmra.mrb[0].mxu0 %v2483
          %v2645 = vpop.f32.mrb[0].mxu0
          %v2646 = vadd.f32 %v2505, %v2645
          %v2647 = vpop.f32.mrb[0].mxu0
          %v2648 = vpop.f32.mrb[0].mxu0
          %v2649 = vadd.f32 %v2505, %v2648
          %v2650 = vpop.f32.mrb[0].mxu0
          %2651 = vdwg.mxu0
          %2652 = vst [vmem:[%s357] sm:$0xff] %v2590
          %2653 = vst [vmem:[%s357 + $0x8] sm:$0xff] %v2593
          %2654 = vst [vmem:[%s357 + $0x10] sm:$0xff] %v2598
          %2655 = vst [vmem:[%s357 + $0x18] sm:$0xff] %v2601
          %2656 = vst [vmem:[%s357 + $0x20] sm:$0xff] %v2606
          %2657 = vst [vmem:[%s357 + $0x28] sm:$0xff] %v2609
          %2658 = vst [vmem:[%s357 + $0x30] sm:$0xff] %v2614
          %2659 = vst [vmem:[%s357 + $0x38] sm:$0xff] %v2617
          %2660 = vst [vmem:[%s357 + $0x40] sm:$0xff] %v2622
          %2661 = vst [vmem:[%s357 + $0x48] sm:$0xff] %v2625
          %2662 = vst [vmem:[%s357 + $0x50] sm:$0xff] %v2630
          %2663 = vst [vmem:[%s357 + $0x58] sm:$0xff] %v2633
          %2664 = vst [vmem:[%s357 + $0x60] sm:$0xff] %v2638
          %2665 = vst [vmem:[%s357 + $0x68] sm:$0xff] %v2641
          %2666 = vst [vmem:[%s357 + $0x70] sm:$0xff] %v2646
          %2667 = vst [vmem:[%s357 + $0x78] sm:$0xff] %v2649
        $region76: #{mnist_network_forward.1} parent=67 // pred_fallthru
          _
      $region68: #{mnist_network_forward.1} parent=55 // pred_fallthru
        _
      %p2668 = scmp.eq.s32.totalorder %s24, 2
      %s2669 = scalar_select %p2668, %s25, 0
      %s2670 = smul.u32 16, %s2669
      %p2671 = scmp.lt.s32.totalorder %s2670, 31
      %s2672 = scalar_select %p2671, %s2670, 31
      %s2673 = smul.addr %s2672, 8
      %s2674 = scalar_lea.vmem %s9, %s2673
      // Predicated region
      $region77: #{mnist_network_forward.1} parent=55 // pred_check
        %p2675 = pneg %p248
      $region78: #{mnist_network_forward.1} parent=55 // pred_check_branch
        %2677 = sbr.rel (%p2675) target = $region80
      $region79: #{mnist_network_forward.1} parent=55 // pred_region
        %p2678 = scmp.eq.s32.totalorder %s24, 2
        %s2679 = scalar_select %p2678, %s25, 0
        %s2680 = smul.u32 16, %s2679
      $region80: #{mnist_network_forward.1} parent=55 // pred_fallthru
        _
    $region56: #{mnist_network_forward.1} parent=5 // pred_fallthru
      _
    %p2681 = scmp.le.s32.totalorder 2, %s15
    // Predicated region
    $region81: #{mnist_network_forward.1} parent=5 // pred_check
      %p2682 = pneg %p2681
    $region82: #{mnist_network_forward.1} parent=5 // pred_check_branch
      %2684 = sbr.rel (%p2682) target = $region84
    $region83: #{mnist_network_forward.1} parent=5 // pred_region
      %s2685 = ssub.s32 %s15, 2
      // Predicated region
      $region85: #{mnist_network_forward.1} parent=83 // pred_check
        %p2686 = pneg %p254
      $region86: #{mnist_network_forward.1} parent=83 // pred_check_branch
        %2688 = sbr.rel (%p2686) target = $region88
      $region87: #{mnist_network_forward.1} parent=83 // pred_region
        %p2689 = scmp.eq.s32.totalorder %s26, 2
        %s2690 = scalar_select %p2689, %s27, 0
        %s2691 = smul.u32 16, %s2690
        %p2692 = scmp.lt.s32.totalorder %s2691, 31
        %s2693 = scalar_select %p2692, %s2691, 31
        %s2694 = smul.addr %s2693, 8
        %s2695 = scalar_lea.vmem %s9, %s2694
      $region88: #{mnist_network_forward.1} parent=83 // pred_fallthru
        _
    $region84: #{mnist_network_forward.1} parent=5 // pred_fallthru
      _
  $region6: #{mnist_network_forward.1} parent=0 // loop_footer
    %s19 = sadd.s32 1, %s15
  $region7: #{mnist_network_forward.1} parent=0 // loop_footer_branch
    %14 = sbr.rel target = $region3
  $region8: #{mnist_network_forward.1} parent=0 // loop_exit
    _

</llo_original>
